<compile_context>
chip_gen: v5e
topology: v5e:2x2
jax: 0.10.0
libtpu: 0.0.40
codegen_flags: <defaults>
</compile_context>

<pallas_src>
import functools

import jax
import jax.numpy as jnp
from jax import lax
from jax.experimental import pallas as pl
from jax.experimental.pallas import tpu as pltpu


def _round_up(x, m):
    return (x + m - 1) // m * m


def _select_tiling():
    """Pick scoped-VMEM limit and max row tile from the chip's VMEM capacity."""
    cap = 128 * 1024 * 1024
    try:
        cap = int(getattr(pltpu.get_tpu_info(), "vmem_capacity_bytes", cap))
    except Exception:      # no TPU visible at import time -> conservative defaults
        pass
    if cap <= 64 * 1024 * 1024:           # v7x-class: 64 MiB physical per TC
        return 48 * 1024 * 1024, 512
    return 64 * 1024 * 1024, 1024         # v5e / v6e: 128 MiB


_VMEM_LIMIT, _TM_CAP = _select_tiling()


def _row_tiling(n, tm):
    """Single padded tile for small n, `tm`-row tiles otherwise."""
    if n <= tm:
        t = _round_up(n, 16)
        return t, t
    return tm, _round_up(n, tm)


# ----------------------------------------------------------------------------
# Fused kernel: coord 1x1-conv MLP + local bilinear one-hot + recover(local) +
#               mse mask + cosine + blend + L2 anomaly score
# ----------------------------------------------------------------------------
def _recover_fuse_kernel(fa_ref, qgw_ref, c1w_ref, c1b_ref, c2w_ref, c2b_ref,
                         q0w_ref, fro_ref, pred_ref, *,
                         L, mse_coef, mse_lamb, cos_lamb):
    fa = fa_ref[...]                                                 # (tm, C) f32
    fa_bf = fa.astype(jnp.bfloat16)

    # coord = tanh(tanh(fa @ W1 + b1) @ W2 + b2)   (the `coord` 1x1-conv stack)
    h = jnp.tanh(jnp.dot(fa_bf, c1w_ref[...],
                         preferred_element_type=jnp.float32) + c1b_ref[...])
    coord = jnp.tanh(jnp.dot(h.astype(jnp.bfloat16), c2w_ref[...],
                             preferred_element_type=jnp.float32) + c2b_ref[...])

    # Bilinear one-hot weights for grid_sample(query0, coord)
    # (align_corners=False, zeros padding): OOB corners match no lane -> weight 0.
    x = coord[:, 0:1]                                                # (tm, 1)
    y = coord[:, 1:2]
    ix = ((x + 1.0) * L - 1.0) * 0.5
    iy = ((y + 1.0) * L - 1.0) * 0.5
    ix0 = jnp.floor(ix)
    iy0 = jnp.floor(iy)
    wx1 = ix - ix0
    wy1 = iy - iy0
    lane = lax.broadcasted_iota(jnp.int32, (1, L * L), 1).astype(jnp.float32)
    rowi = jnp.floor(lane / float(L))
    coli = lane - rowi * float(L)
    wy = ((rowi == iy0).astype(jnp.float32) * (1.0 - wy1)
          + (rowi == iy0 + 1.0).astype(jnp.float32) * wy1)
    wx = ((coli == ix0).astype(jnp.float32) * (1.0 - wx1)
          + (coli == ix0 + 1.0).astype(jnp.float32) * wx1)
    wloc = (wy * wx).astype(jnp.bfloat16)                            # (tm, L*L)

    # feature_rec = recover(cat([global, local]))
    #             = (q_global @ Wg)  +  wloc_onehot @ (Q0 @ Wl)
    fr = (qgw_ref[...].astype(jnp.float32)
          + jnp.dot(wloc, q0w_ref[...], preferred_element_type=jnp.float32))

    diff = fr - fa
    mse = jnp.mean(diff * diff, axis=-1, keepdims=True)              # (tm, 1)
    mask = 1.0 - jnp.round(jnp.clip(mse * mse_coef, 0.0, 1.0))
    num = jnp.sum(fr * fa, axis=-1, keepdims=True)
    sfr = jnp.sum(fr * fr, axis=-1, keepdims=True)
    sfa = jnp.sum(fa * fa, axis=-1, keepdims=True)
    # torch F.cosine_similarity: per-vector norms clamped at eps=1e-8
    cos = (num * lax.rsqrt(jnp.maximum(sfr, 1e-16))
               * lax.rsqrt(jnp.maximum(sfa, 1e-16)))
    sim = mse_lamb * mask + cos_lamb * cos                           # (tm, 1)
    fr_out = sim * fa + (1.0 - sim) * fr
    fro_ref[...] = fr_out

    # lane-dense anomaly score: (1, C) @ (tm, C)^T contraction -> (1, tm)
    d = fr_out - fa
    ones_row = jnp.ones((1, d.shape[1]), jnp.float32)
    ssq = lax.dot_general(ones_row, d * d, (((1,), (1,)), ((), ())),
                          preferred_element_type=jnp.float32)
    pred_ref[...] = jnp.sqrt(ssq)


def recover_fuse(fa_flat, qgw, c1w, c1b, c2w, c2b, q0w, *,
                 L, mse_coef, mse_lamb, cos_lamb):
    n, c = fa_flat.shape
    ll = q0w.shape[0]
    tm, n_pad = _row_tiling(n, _TM_CAP)
    pad = n_pad - n
    if pad:
        fa_flat = jnp.pad(fa_flat, ((0, pad), (0, 0)))
        qgw = jnp.pad(qgw, ((0, pad), (0, 0)))
    kern = functools.partial(_recover_fuse_kernel, L=L, mse_coef=mse_coef,
                             mse_lamb=mse_lamb, cos_lamb=cos_lamb)
    nt = n_pad // tm
    fro, pred = pl.pallas_call(
        kern,
        out_shape=(jax.ShapeDtypeStruct((n_pad, c), jnp.float32),
                   jax.ShapeDtypeStruct((1, n_pad), jnp.float32)),
        grid_spec=pltpu.PrefetchScalarGridSpec(
            num_scalar_prefetch=0,
            grid=(nt,),
            in_specs=[pl.BlockSpec((tm, c), lambda i: (i, 0)),      # fa   (f32)
                      pl.BlockSpec((tm, c), lambda i: (i, 0)),      # qgw  (bf16)
                      pl.BlockSpec((c, c), lambda i: (0, 0)),       # conv1_w
                      pl.BlockSpec((1, c), lambda i: (0, 0)),       # conv1_b
                      pl.BlockSpec((c, 2), lambda i: (0, 0)),       # conv2_w
                      pl.BlockSpec((1, 2), lambda i: (0, 0)),       # conv2_b
                      pl.BlockSpec((ll, c), lambda i: (0, 0))],     # Q0 @ Wl
            out_specs=[pl.BlockSpec((tm, c), lambda i: (i, 0)),
                       pl.BlockSpec((1, tm), lambda i: (0, i))]),
        compiler_params=pltpu.CompilerParams(
            dimension_semantics=("parallel",),
            vmem_limit_bytes=_VMEM_LIMIT),
    )(fa_flat, qgw, c1w, c1b, c2w, c2b, q0w)
    return fro[:n], pred[0, :n]


# ----------------------------------------------------------------------------
# Bilinear x8 upsample (align_corners=True) as two interpolation matmuls,
# gridded over the batch so it pipelines and shards across TensorCores.
# ----------------------------------------------------------------------------
def _upsample_kernel(p_ref, rh_ref, rwt_ref, o_ref):
    tmp = jnp.dot(rh_ref[...], p_ref[0], preferred_element_type=jnp.float32)   # (Ho, W)
    o_ref[0] = jnp.dot(tmp, rwt_ref[...], preferred_element_type=jnp.float32)  # (Ho, Wo)


def upsample_bilinear_ac(pred, rh, rwt):
    b, h, w = pred.shape
    ho, wo = rh.shape[0], rwt.shape[1]
    return pl.pallas_call(
        _upsample_kernel,
        out_shape=jax.ShapeDtypeStruct((b, ho, wo), jnp.float32),
        grid_spec=pltpu.PrefetchScalarGridSpec(
            num_scalar_prefetch=0,
            grid=(b,),
            in_specs=[pl.BlockSpec((1, h, w), lambda i: (i, 0, 0)),
                      pl.BlockSpec((ho, h), lambda i: (0, 0)),
                      pl.BlockSpec((w, wo), lambda i: (0, 0))],
            out_specs=pl.BlockSpec((1, ho, wo), lambda i: (i, 0, 0))),
        compiler_params=pltpu.CompilerParams(
            dimension_semantics=("parallel",),
            vmem_limit_bytes=_VMEM_LIMIT),
    )(pred, rh, rwt)


# ----------------------------------------------------------------------------
# Plain-JAX glue (tiny, gather-free)
# ----------------------------------------------------------------------------
def bilinear_weights(coords_xy, hin, win):
    """F.grid_sample (bilinear, align_corners=False, zeros padding) as a dense
    weight matrix: coords (N, 2) -> (N, hin*win).  Comparison-built, no gather."""
    x = coords_xy[:, 0]
    y = coords_xy[:, 1]
    ix = ((x + 1.0) * win - 1.0) * 0.5
    iy = ((y + 1.0) * hin - 1.0) * 0.5
    ix0 = jnp.floor(ix)
    iy0 = jnp.floor(iy)
    wx1 = ix - ix0
    wy1 = iy - iy0
    cols = jnp.arange(win, dtype=jnp.float32)[None, :]
    rows = jnp.arange(hin, dtype=jnp.float32)[None, :]
    wx = ((ix0[:, None] == cols) * (1.0 - wx1)[:, None]
          + ((ix0 + 1.0)[:, None] == cols) * wx1[:, None])          # (N, win)
    wy = ((iy0[:, None] == rows) * (1.0 - wy1)[:, None]
          + ((iy0 + 1.0)[:, None] == rows) * wy1[:, None])          # (N, hin)
    wmat = wy[:, :, None] * wx[:, None, :]                          # (N, hin, win)
    return wmat.reshape(-1, hin * win).astype(jnp.float32)


def interp_matrix(n_in, scale):
    """Interpolation matrix for UpsamplingBilinear2d (align_corners=True)."""
    n_out = n_in * scale
    if n_in == 1:
        return jnp.ones((n_out, 1), jnp.float32)
    pos = jnp.arange(n_out, dtype=jnp.float32) * (n_in - 1) / (n_out - 1)
    i0 = jnp.clip(jnp.floor(pos), 0.0, n_in - 2.0)
    w1 = pos - i0
    cols = jnp.arange(n_in, dtype=jnp.float32)[None, :]
    m = ((cols == i0[:, None]) * (1.0 - w1)[:, None]
         + (cols == (i0 + 1.0)[:, None]) * w1[:, None])
    return m.astype(jnp.float32)


# ----------------------------------------------------------------------------
# Parameters: deterministic synthetic init + one-time prep (outside jit)
# ----------------------------------------------------------------------------
def init_params(key, C, H, W, local_resol, global_resol):
    ks = jax.random.split(key, 9)

    def xavier(k, shape, fan_in, fan_out):
        std = (2.0 / (fan_in + fan_out)) ** 0.5
        return std * jax.random.normal(k, shape, jnp.float32)

    chw = C * H * W
    return {
        # nn.ParameterList query
        "query0": xavier(ks[0], (1, C, local_resol, local_resol),
                         C * local_resol * local_resol, local_resol * local_resol),
        "query1": xavier(ks[1], (1, chw, global_resol, global_resol),
                         chw * global_resol * global_resol,
                         global_resol * global_resol),
        # coord_ : Linear(C,C) -> Tanh -> Linear(C,2) -> Tanh  (stored as (in,out))
        "lin1_w": xavier(ks[2], (C, C), C, C),
        "lin1_b": jnp.zeros((1, C), jnp.float32),
        "lin2_w": xavier(ks[3], (C, 2), C, 2),
        "lin2_b": jnp.zeros((1, 2), jnp.float32),
        # coord : Conv1x1(C,C) -> Tanh -> Conv1x1(C,2) -> Tanh (stored as (in,out))
        "conv1_w": xavier(ks[4], (C, C), C, C),
        "conv1_b": 0.01 * jax.random.normal(ks[5], (1, C), jnp.float32),
        "conv2_w": xavier(ks[6], (C, 2), C, 2),
        "conv2_b": 0.01 * jax.random.normal(ks[7], (1, 2), jnp.float32),
        # recover : conv1x1(2C, C), bias=False (stored as (2C, C))
        "recover_w": xavier(ks[8], (2 * C, C), 2 * C, C),
    }


def prepare_params(params):
    """One-time prep (call OUTSIDE jit): permute query1 to channels-last, fold the
    global half of the recover conv into it, pre-fold Q0 @ Wl, pre-cast to bf16."""
    C = params["conv1_w"].shape[0]
    L = params["query0"].shape[-1]
    G = params["query1"].shape[-1]
    HW = params["query1"].shape[1] // C
    wg = params["recover_w"][:C]                                    # global half
    wl = params["recover_w"][C:]                                    # local half
    q1 = (params["query1"][0].reshape(C, HW, G, G)
          .transpose(2, 3, 1, 0).reshape(G * G, HW, C))             # channels-last
    q1g = jnp.matmul(q1, wg).reshape(G * G, HW * C).astype(jnp.bfloat16)
    q0w = (params["query0"][0].reshape(C, L * L).T @ wl).astype(jnp.bfloat16)
    return {
        "lin1_w": params["lin1_w"], "lin1_b": params["lin1_b"],
        "lin2_w": params["lin2_w"], "lin2_b": params["lin2_b"],
        "conv1_w": params["conv1_w"].astype(jnp.bfloat16),
        "conv1_b": params["conv1_b"],
        "conv2_w": params["conv2_w"].astype(jnp.bfloat16),
        "conv2_b": params["conv2_b"],
        "q1g": q1g,      # (G*G, H*W*C), Wg folded, bf16
        "q0w": q0w,      # (L*L, C),     Wl folded, bf16
    }


# ----------------------------------------------------------------------------
# Forward (eval mode)
# ----------------------------------------------------------------------------
def crad_forward(model, feature_align, *, mse_lamb, cos_lamb, mse_coef):
    """Eval-mode CRAD.forward. feature_align: NCHW (B, C, H, W)."""
    B, C, H, W = feature_align.shape
    N = B * H * W

    # channels-last once at entry
    fa_nhwc = feature_align.astype(jnp.float32).transpose(0, 2, 3, 1)   # (B,H,W,C)
    fa_flat = fa_nhwc.reshape(N, C)

    # coord_ = MLP(adaptive_avg_pool2d(fa, 1))  -- B rows, plain JAX (tiny)
    pooled = jnp.mean(fa_nhwc, axis=(1, 2))                             # (B, C)
    hvec = jnp.tanh(pooled @ model["lin1_w"] + model["lin1_b"])
    coord_vec = jnp.tanh(hvec @ model["lin2_w"] + model["lin2_b"])      # (B, 2)

    # TODO(synk): training-mode gaussian noise on `coord` skipped (eval forward).

    GG = model["q1g"].shape[0]
    G = int(round(GG ** 0.5))
    LL = model["q0w"].shape[0]
    L = int(round(LL ** 0.5))

    # global query contribution to the recover output, emitted directly in bf16:
    #   (B, G*G) @ (G*G, H*W*C)  ->  (N, C)          (Wg already folded at prep)
    w_glb = bilinear_weights(coord_vec, G, G).astype(jnp.bfloat16)      # (B, G*G)
    qgw = jnp.dot(w_glb, model["q1g"],
                  preferred_element_type=jnp.float32).astype(jnp.bfloat16)
    qgw = qgw.reshape(N, C)

    # TODO(synk): self.layer (MobileBottleneck stack) is not defined in the
    # reference; treated as identity (layers=0).

    # fused: coord conv-MLP + local one-hot + recover + mask/cos/blend/score  [Pallas]
    fr_out_flat, pred_flat = recover_fuse(
        fa_flat, qgw, model["conv1_w"], model["conv1_b"],
        model["conv2_w"], model["conv2_b"], model["q0w"],
        L=L, mse_coef=mse_coef, mse_lamb=mse_lamb, cos_lamb=cos_lamb)

    feature_rec = fr_out_flat.reshape(B, H, W, C).transpose(0, 3, 1, 2)
    pred = pred_flat.reshape(B, H, W)

    # UpsamplingBilinear2d(scale_factor=8)                                 [Pallas]
    rh = interp_matrix(H, 8)
    rwt = interp_matrix(W, 8).T
    pred_up = upsample_bilinear_ac(pred, rh, rwt)[:, None, :, :]          # (B,1,8H,8W)

    # TODO(synk): save_recon file dumping is host I/O and is not implemented.
    return {"feature_rec": feature_rec,
            "feature_align": feature_align,
            "pred": pred_up}


# ----------------------------------------------------------------------------
if __name__ == "__main__":
    B, C, H, W = 2, 16, 8, 8           # small shapes; module implies 2C recover input
    LOCAL_RESOL, GLOBAL_RESOL = 4, 6
    MSE_LAMB, COS_LAMB, MSE_COEF = 0.5, 0.5, 5.0

    key = jax.random.PRNGKey(0)
    k_in, k_par = jax.random.split(key)
    feature_align = jax.random.normal(k_in, (B, C, H, W), jnp.float32)
    params = init_params(k_par, C, H, W, LOCAL_RESOL, GLOBAL_RESOL)
    model = prepare_params(params)     # one-time prep, outside the jit

    fwd = jax.jit(functools.partial(crad_forward, mse_lamb=MSE_LAMB,
                                    cos_lamb=COS_LAMB, mse_coef=MSE_COEF))
    out = fwd(model, feature_align)
    jax.block_until_ready(out)

    assert out["feature_rec"].shape == (B, C, H, W)
    assert out["feature_align"].shape == (B, C, H, W)
    assert out["pred"].shape == (B, 1, 8 * H, 8 * W)
    assert bool(jnp.all(jnp.isfinite(out["feature_rec"])))
    assert bool(jnp.all(jnp.isfinite(out["pred"])))
    print("KERNEL_OK")
</pallas_src>

<mosaic_0001>
module attributes {stable_mosaic.version = 11 : i64} {
  func.func @_recover_fuse_kernel(%arg0: i32, %arg1: memref<128x16xf32, #tpu.memory_space<vmem>>, %arg2: memref<128x16xbf16, #tpu.memory_space<vmem>>, %arg3: memref<16x16xbf16, #tpu.memory_space<vmem>>, %arg4: memref<1x16xf32, #tpu.memory_space<vmem>>, %arg5: memref<16x2xbf16, #tpu.memory_space<vmem>>, %arg6: memref<1x2xf32, #tpu.memory_space<vmem>>, %arg7: memref<16x16xbf16, #tpu.memory_space<vmem>>, %arg8: memref<128x16xf32, #tpu.memory_space<vmem>>, %arg9: memref<1x128xf32, #tpu.memory_space<vmem>>) attributes {dimension_semantics = [#tpu.dimension_semantics<parallel>], iteration_bounds = array<i64: 1>, scalar_prefetch = 0 : i64, scratch_operands = 0 : i64, tpu.core_type = #tpu.core_type<tc>, window_params = [{transform_indices = @transform_0, window_bounds = array<i64: 128, 16>}, {transform_indices = @transform_1, window_bounds = array<i64: 128, 16>}, {pipeline_mode = #tpu.pipeline_mode<synchronous>, transform_indices = @transform_2, window_bounds = array<i64: 16, 16>}, {pipeline_mode = #tpu.pipeline_mode<synchronous>, transform_indices = @transform_3, window_bounds = array<i64: 1, 16>}, {pipeline_mode = #tpu.pipeline_mode<synchronous>, transform_indices = @transform_4, window_bounds = array<i64: 16, 2>}, {pipeline_mode = #tpu.pipeline_mode<synchronous>, transform_indices = @transform_5, window_bounds = array<i64: 1, 2>}, {pipeline_mode = #tpu.pipeline_mode<synchronous>, transform_indices = @transform_6, window_bounds = array<i64: 16, 16>}, {transform_indices = @transform_7, window_bounds = array<i64: 128, 16>}, {transform_indices = @transform_8, window_bounds = array<i64: 1, 128>}]} {
    %c0 = arith.constant 0 : index
    %c0_0 = arith.constant 0 : index
    %0 = vector.load %arg1[%c0, %c0_0] : memref<128x16xf32, #tpu.memory_space<vmem>>, vector<128x16xf32>
    %1 = arith.truncf %0 : vector<128x16xf32> to vector<128x16xbf16>
    %c0_1 = arith.constant 0 : index
    %c0_2 = arith.constant 0 : index
    %2 = vector.load %arg3[%c0_1, %c0_2] : memref<16x16xbf16, #tpu.memory_space<vmem>>, vector<16x16xbf16>
    %cst = arith.constant dense<0.000000e+00> : vector<128x16xf32>
    %3 = tpu.matmul %1, %2, %cst {dimension_numbers = #tpu.dot_dimension_numbers<[1], [0], [0], [1], [0, 0, 1, 1], [], []>} : vector<128x16xbf16>, vector<16x16xbf16>, vector<128x16xf32> -> vector<128x16xf32>
    %c0_3 = arith.constant 0 : index
    %c0_4 = arith.constant 0 : index
    %4 = vector.load %arg4[%c0_3, %c0_4] : memref<1x16xf32, #tpu.memory_space<vmem>>, vector<1x16xf32>
    %5 = vector.broadcast %4 : vector<1x16xf32> to vector<128x16xf32>
    %6 = arith.addf %3, %5 : vector<128x16xf32>
    %7 = math.tanh %6 : vector<128x16xf32>
    %8 = arith.truncf %7 : vector<128x16xf32> to vector<128x16xbf16>
    %c0_5 = arith.constant 0 : index
    %c0_6 = arith.constant 0 : index
    %9 = vector.load %arg5[%c0_5, %c0_6] : memref<16x2xbf16, #tpu.memory_space<vmem>>, vector<16x2xbf16>
    %cst_7 = arith.constant dense<0.000000e+00> : vector<128x2xf32>
    %10 = tpu.matmul %8, %9, %cst_7 {dimension_numbers = #tpu.dot_dimension_numbers<[1], [0], [0], [1], [0, 0, 1, 1], [], []>} : vector<128x16xbf16>, vector<16x2xbf16>, vector<128x2xf32> -> vector<128x2xf32>
    %c0_8 = arith.constant 0 : index
    %c0_9 = arith.constant 0 : index
    %11 = vector.load %arg6[%c0_8, %c0_9] : memref<1x2xf32, #tpu.memory_space<vmem>>, vector<1x2xf32>
    %12 = vector.broadcast %11 : vector<1x2xf32> to vector<128x2xf32>
    %13 = arith.addf %10, %12 : vector<128x2xf32>
    %14 = math.tanh %13 : vector<128x2xf32>
    %15 = vector.extract_strided_slice %14 {offsets = [0, 0], sizes = [128, 1], strides = [1, 1]} : vector<128x2xf32> to vector<128x1xf32>
    %16 = vector.extract_strided_slice %14 {offsets = [0, 1], sizes = [128, 1], strides = [1, 1]} : vector<128x2xf32> to vector<128x1xf32>
    %cst_10 = arith.constant 1.000000e+00 : f32
    %17 = vector.broadcast %cst_10 : f32 to vector<128x1xf32>
    %18 = arith.addf %15, %17 : vector<128x1xf32>
    %cst_11 = arith.constant 4.000000e+00 : f32
    %19 = vector.broadcast %cst_11 : f32 to vector<128x1xf32>
    %20 = arith.mulf %18, %19 : vector<128x1xf32>
    %cst_12 = arith.constant 1.000000e+00 : f32
    %21 = vector.broadcast %cst_12 : f32 to vector<128x1xf32>
    %22 = arith.subf %20, %21 : vector<128x1xf32>
    %cst_13 = arith.constant 5.000000e-01 : f32
    %23 = vector.broadcast %cst_13 : f32 to vector<128x1xf32>
    %24 = arith.mulf %22, %23 : vector<128x1xf32>
    %cst_14 = arith.constant 1.000000e+00 : f32
    %25 = vector.broadcast %cst_14 : f32 to vector<128x1xf32>
    %26 = arith.addf %16, %25 : vector<128x1xf32>
    %cst_15 = arith.constant 4.000000e+00 : f32
    %27 = vector.broadcast %cst_15 : f32 to vector<128x1xf32>
    %28 = arith.mulf %26, %27 : vector<128x1xf32>
    %cst_16 = arith.constant 1.000000e+00 : f32
    %29 = vector.broadcast %cst_16 : f32 to vector<128x1xf32>
    %30 = arith.subf %28, %29 : vector<128x1xf32>
    %cst_17 = arith.constant 5.000000e-01 : f32
    %31 = vector.broadcast %cst_17 : f32 to vector<128x1xf32>
    %32 = arith.mulf %30, %31 : vector<128x1xf32>
    %33 = math.floor %24 : vector<128x1xf32>
    %34 = math.floor %32 : vector<128x1xf32>
    %35 = arith.subf %24, %33 : vector<128x1xf32>
    %36 = arith.subf %32, %34 : vector<128x1xf32>
    %37 = tpu.iota {dimensions = array<i32: 1>} : vector<1x16xi32>
    %38 = arith.sitofp %37 : vector<1x16xi32> to vector<1x16xf32>
    %cst_18 = arith.constant 4.000000e+00 : f32
    %39 = vector.broadcast %cst_18 : f32 to vector<1x16xf32>
    %40 = arith.divf %38, %39 : vector<1x16xf32>
    %41 = math.floor %40 : vector<1x16xf32>
    %cst_19 = arith.constant 4.000000e+00 : f32
    %42 = vector.broadcast %cst_19 : f32 to vector<1x16xf32>
    %43 = arith.mulf %41, %42 : vector<1x16xf32>
    %44 = arith.subf %38, %43 : vector<1x16xf32>
    %45 = vector.broadcast %41 : vector<1x16xf32> to vector<128x16xf32>
    %46 = vector.broadcast %34 : vector<128x1xf32> to vector<128x16xf32>
    %47 = arith.cmpf oeq, %45, %46 : vector<128x16xf32>
    %48 = arith.extui %47 : vector<128x16xi1> to vector<128x16xi32>
    %49 = arith.sitofp %48 : vector<128x16xi32> to vector<128x16xf32>
    %cst_20 = arith.constant 1.000000e+00 : f32
    %50 = vector.broadcast %cst_20 : f32 to vector<128x1xf32>
    %51 = arith.subf %50, %36 : vector<128x1xf32>
    %52 = vector.broadcast %51 : vector<128x1xf32> to vector<128x16xf32>
    %53 = arith.mulf %49, %52 : vector<128x16xf32>
    %cst_21 = arith.constant 1.000000e+00 : f32
    %54 = vector.broadcast %cst_21 : f32 to vector<128x1xf32>
    %55 = arith.addf %34, %54 : vector<128x1xf32>
    %56 = vector.broadcast %41 : vector<1x16xf32> to vector<128x16xf32>
    %57 = vector.broadcast %55 : vector<128x1xf32> to vector<128x16xf32>
    %58 = arith.cmpf oeq, %56, %57 : vector<128x16xf32>
    %59 = arith.extui %58 : vector<128x16xi1> to vector<128x16xi32>
    %60 = arith.sitofp %59 : vector<128x16xi32> to vector<128x16xf32>
    %61 = vector.broadcast %36 : vector<128x1xf32> to vector<128x16xf32>
    %62 = arith.mulf %60, %61 : vector<128x16xf32>
    %63 = arith.addf %53, %62 : vector<128x16xf32>
    %64 = vector.broadcast %44 : vector<1x16xf32> to vector<128x16xf32>
    %65 = vector.broadcast %33 : vector<128x1xf32> to vector<128x16xf32>
    %66 = arith.cmpf oeq, %64, %65 : vector<128x16xf32>
    %67 = arith.extui %66 : vector<128x16xi1> to vector<128x16xi32>
    %68 = arith.sitofp %67 : vector<128x16xi32> to vector<128x16xf32>
    %cst_22 = arith.constant 1.000000e+00 : f32
    %69 = vector.broadcast %cst_22 : f32 to vector<128x1xf32>
    %70 = arith.subf %69, %35 : vector<128x1xf32>
    %71 = vector.broadcast %70 : vector<128x1xf32> to vector<128x16xf32>
    %72 = arith.mulf %68, %71 : vector<128x16xf32>
    %cst_23 = arith.constant 1.000000e+00 : f32
    %73 = vector.broadcast %cst_23 : f32 to vector<128x1xf32>
    %74 = arith.addf %33, %73 : vector<128x1xf32>
    %75 = vector.broadcast %44 : vector<1x16xf32> to vector<128x16xf32>
    %76 = vector.broadcast %74 : vector<128x1xf32> to vector<128x16xf32>
    %77 = arith.cmpf oeq, %75, %76 : vector<128x16xf32>
    %78 = arith.extui %77 : vector<128x16xi1> to vector<128x16xi32>
    %79 = arith.sitofp %78 : vector<128x16xi32> to vector<128x16xf32>
    %80 = vector.broadcast %35 : vector<128x1xf32> to vector<128x16xf32>
    %81 = arith.mulf %79, %80 : vector<128x16xf32>
    %82 = arith.addf %72, %81 : vector<128x16xf32>
    %83 = arith.mulf %63, %82 : vector<128x16xf32>
    %84 = arith.truncf %83 : vector<128x16xf32> to vector<128x16xbf16>
    %c0_24 = arith.constant 0 : index
    %c0_25 = arith.constant 0 : index
    %85 = vector.load %arg2[%c0_24, %c0_25] : memref<128x16xbf16, #tpu.memory_space<vmem>>, vector<128x16xbf16>
    %86 = arith.extf %85 : vector<128x16xbf16> to vector<128x16xf32>
    %c0_26 = arith.constant 0 : index
    %c0_27 = arith.constant 0 : index
    %87 = vector.load %arg7[%c0_26, %c0_27] : memref<16x16xbf16, #tpu.memory_space<vmem>>, vector<16x16xbf16>
    %cst_28 = arith.constant dense<0.000000e+00> : vector<128x16xf32>
    %88 = tpu.matmul %84, %87, %cst_28 {dimension_numbers = #tpu.dot_dimension_numbers<[1], [0], [0], [1], [0, 0, 1, 1], [], []>} : vector<128x16xbf16>, vector<16x16xbf16>, vector<128x16xf32> -> vector<128x16xf32>
    %89 = arith.addf %86, %88 : vector<128x16xf32>
    %90 = arith.subf %89, %0 : vector<128x16xf32>
    %91 = arith.mulf %90, %90 : vector<128x16xf32>
    %cst_29 = arith.constant dense<0.000000e+00> : vector<128xf32>
    %92 = vector.multi_reduction <add>, %91, %cst_29 [1] : vector<128x16xf32> to vector<128xf32>
    %93 = vector.shape_cast %92 : vector<128xf32> to vector<128x1xf32>
    %cst_30 = arith.constant 1.600000e+01 : f32
    %94 = vector.broadcast %cst_30 : f32 to vector<128x1xf32>
    %95 = arith.divf %93, %94 : vector<128x1xf32>
    %cst_31 = arith.constant 5.000000e+00 : f32
    %96 = vector.broadcast %cst_31 : f32 to vector<128x1xf32>
    %97 = arith.mulf %95, %96 : vector<128x1xf32>
    %cst_32 = arith.constant 0.000000e+00 : f32
    %cst_33 = arith.constant 1.000000e+00 : f32
    %98 = vector.broadcast %cst_32 : f32 to vector<128x1xf32>
    %99 = arith.maximumf %98, %97 : vector<128x1xf32>
    %100 = vector.broadcast %cst_33 : f32 to vector<128x1xf32>
    %101 = arith.minimumf %100, %99 : vector<128x1xf32>
    %102 = math.roundeven %101 : vector<128x1xf32>
    %cst_34 = arith.constant 1.000000e+00 : f32
    %103 = vector.broadcast %cst_34 : f32 to vector<128x1xf32>
    %104 = arith.subf %103, %102 : vector<128x1xf32>
    %105 = arith.mulf %89, %0 : vector<128x16xf32>
    %cst_35 = arith.constant dense<0.000000e+00> : vector<128xf32>
    %106 = vector.multi_reduction <add>, %105, %cst_35 [1] : vector<128x16xf32> to vector<128xf32>
    %107 = vector.shape_cast %106 : vector<128xf32> to vector<128x1xf32>
    %108 = arith.mulf %89, %89 : vector<128x16xf32>
    %cst_36 = arith.constant dense<0.000000e+00> : vector<128xf32>
    %109 = vector.multi_reduction <add>, %108, %cst_36 [1] : vector<128x16xf32> to vector<128xf32>
    %110 = vector.shape_cast %109 : vector<128xf32> to vector<128x1xf32>
    %111 = arith.mulf %0, %0 : vector<128x16xf32>
    %cst_37 = arith.constant dense<0.000000e+00> : vector<128xf32>
    %112 = vector.multi_reduction <add>, %111, %cst_37 [1] : vector<128x16xf32> to vector<128xf32>
    %113 = vector.shape_cast %112 : vector<128xf32> to vector<128x1xf32>
    %cst_38 = arith.constant 1.000000e-16 : f32
    %114 = vector.broadcast %cst_38 : f32 to vector<128x1xf32>
    %115 = arith.maximumf %110, %114 : vector<128x1xf32>
    %116 = math.rsqrt %115 : vector<128x1xf32>
    %117 = arith.mulf %107, %116 : vector<128x1xf32>
    %cst_39 = arith.constant 1.000000e-16 : f32
    %118 = vector.broadcast %cst_39 : f32 to vector<128x1xf32>
    %119 = arith.maximumf %113, %118 : vector<128x1xf32>
    %120 = math.rsqrt %119 : vector<128x1xf32>
    %121 = arith.mulf %117, %120 : vector<128x1xf32>
    %cst_40 = arith.constant 5.000000e-01 : f32
    %122 = vector.broadcast %cst_40 : f32 to vector<128x1xf32>
    %123 = arith.mulf %122, %104 : vector<128x1xf32>
    %cst_41 = arith.constant 5.000000e-01 : f32
    %124 = vector.broadcast %cst_41 : f32 to vector<128x1xf32>
    %125 = arith.mulf %124, %121 : vector<128x1xf32>
    %126 = arith.addf %123, %125 : vector<128x1xf32>
    %127 = vector.broadcast %126 : vector<128x1xf32> to vector<128x16xf32>
    %128 = arith.mulf %127, %0 : vector<128x16xf32>
    %cst_42 = arith.constant 1.000000e+00 : f32
    %129 = vector.broadcast %cst_42 : f32 to vector<128x1xf32>
    %130 = arith.subf %129, %126 : vector<128x1xf32>
    %131 = vector.broadcast %130 : vector<128x1xf32> to vector<128x16xf32>
    %132 = arith.mulf %131, %89 : vector<128x16xf32>
    %133 = arith.addf %128, %132 : vector<128x16xf32>
    %c0_43 = arith.constant 0 : index
    %c0_44 = arith.constant 0 : index
    %134 = vector.load %arg8[%c0_43, %c0_44] : memref<128x16xf32, #tpu.memory_space<vmem>>, vector<128x16xf32>
    tpu.vector_store %arg8[%c0_43, %c0_44], %133 {strides = array<i32>} : memref<128x16xf32, #tpu.memory_space<vmem>>, vector<128x16xf32>,
    %135 = arith.subf %133, %0 : vector<128x16xf32>
    %cst_45 = arith.constant 1.000000e+00 : f32
    %136 = vector.broadcast %cst_45 : f32 to vector<1x16xf32>
    %137 = arith.mulf %135, %135 : vector<128x16xf32>
    %cst_46 = arith.constant dense<0.000000e+00> : vector<1x128xf32>
    %138 = tpu.matmul %136, %137, %cst_46 {dimension_numbers = #tpu.dot_dimension_numbers<[1], [1], [0], [0], [0, 0, 1, 0], [], []>} : vector<1x16xf32>, vector<128x16xf32>, vector<1x128xf32> -> vector<1x128xf32>
    %139 = math.sqrt %138 : vector<1x128xf32>
    %c0_47 = arith.constant 0 : index
    %c0_48 = arith.constant 0 : index
    %140 = vector.load %arg9[%c0_47, %c0_48] : memref<1x128xf32, #tpu.memory_space<vmem>>, vector<1x128xf32>
    tpu.vector_store %arg9[%c0_47, %c0_48], %139 {strides = array<i32>} : memref<1x128xf32, #tpu.memory_space<vmem>>, vector<1x128xf32>,
    return
  }
  func.func @transform_0(%arg0: i32) -> (i32, i32) {
    %c0_i32 = arith.constant 0 : i32
    %c0_i32_0 = arith.constant 0 : i32
    return %arg0, %c0_i32 : i32, i32
  }
  func.func @transform_1(%arg0: i32) -> (i32, i32) {
    %c0_i32 = arith.constant 0 : i32
    %c0_i32_0 = arith.constant 0 : i32
    return %arg0, %c0_i32 : i32, i32
  }
  func.func @transform_2(%arg0: i32) -> (i32, i32) {
    %c0_i32 = arith.constant 0 : i32
    %c0_i32_0 = arith.constant 0 : i32
    %c0_i32_1 = arith.constant 0 : i32
    return %c0_i32, %c0_i32_0 : i32, i32
  }
  func.func @transform_3(%arg0: i32) -> (i32, i32) {
    %c0_i32 = arith.constant 0 : i32
    %c0_i32_0 = arith.constant 0 : i32
    %c0_i32_1 = arith.constant 0 : i32
    return %c0_i32, %c0_i32_0 : i32, i32
  }
  func.func @transform_4(%arg0: i32) -> (i32, i32) {
    %c0_i32 = arith.constant 0 : i32
    %c0_i32_0 = arith.constant 0 : i32
    %c0_i32_1 = arith.constant 0 : i32
    return %c0_i32, %c0_i32_0 : i32, i32
  }
  func.func @transform_5(%arg0: i32) -> (i32, i32) {
    %c0_i32 = arith.constant 0 : i32
    %c0_i32_0 = arith.constant 0 : i32
    %c0_i32_1 = arith.constant 0 : i32
    return %c0_i32, %c0_i32_0 : i32, i32
  }
  func.func @transform_6(%arg0: i32) -> (i32, i32) {
    %c0_i32 = arith.constant 0 : i32
    %c0_i32_0 = arith.constant 0 : i32
    %c0_i32_1 = arith.constant 0 : i32
    return %c0_i32, %c0_i32_0 : i32, i32
  }
  func.func @transform_7(%arg0: i32) -> (i32, i32) {
    %c0_i32 = arith.constant 0 : i32
    %c0_i32_0 = arith.constant 0 : i32
    return %arg0, %c0_i32 : i32, i32
  }
  func.func @transform_8(%arg0: i32) -> (i32, i32) {
    %c0_i32 = arith.constant 0 : i32
    %c0_i32_0 = arith.constant 0 : i32
    return %c0_i32, %arg0 : i32, i32
  }
}

module attributes {stable_mosaic.version = 11 : i64} {
  func.func @_upsample_kernel(%arg0: i32, %arg1: memref<1x8x8xf32, #tpu.memory_space<vmem>>, %arg2: memref<64x8xf32, #tpu.memory_space<vmem>>, %arg3: memref<8x64xf32, #tpu.memory_space<vmem>>, %arg4: memref<1x64x64xf32, #tpu.memory_space<vmem>>) attributes {dimension_semantics = [#tpu.dimension_semantics<parallel>], iteration_bounds = array<i64: 2>, scalar_prefetch = 0 : i64, scratch_operands = 0 : i64, tpu.core_type = #tpu.core_type<tc>, window_params = [{transform_indices = @transform_0, window_bounds = array<i64: 1, 8, 8>}, {pipeline_mode = #tpu.pipeline_mode<synchronous>, transform_indices = @transform_1, window_bounds = array<i64: 64, 8>}, {pipeline_mode = #tpu.pipeline_mode<synchronous>, transform_indices = @transform_2, window_bounds = array<i64: 8, 64>}, {transform_indices = @transform_3, window_bounds = array<i64: 1, 64, 64>}]} {
    %c0 = arith.constant 0 : index
    %c0_0 = arith.constant 0 : index
    %0 = vector.load %arg2[%c0, %c0_0] : memref<64x8xf32, #tpu.memory_space<vmem>>, vector<64x8xf32>
    %c0_1 = arith.constant 0 : index
    %c0_2 = arith.constant 0 : index
    %c0_3 = arith.constant 0 : index
    %1 = vector.load %arg1[%c0_1, %c0_2, %c0_3] : memref<1x8x8xf32, #tpu.memory_space<vmem>>, vector<1x8x8xf32>
    %2 = vector.shape_cast %1 : vector<1x8x8xf32> to vector<8x8xf32>
    %cst = arith.constant dense<0.000000e+00> : vector<64x8xf32>
    %3 = tpu.matmul %0, %2, %cst {dimension_numbers = #tpu.dot_dimension_numbers<[1], [0], [0], [1], [0, 0, 1, 1], [], []>} : vector<64x8xf32>, vector<8x8xf32>, vector<64x8xf32> -> vector<64x8xf32>
    %c0_4 = arith.constant 0 : index
    %c0_5 = arith.constant 0 : index
    %4 = vector.load %arg3[%c0_4, %c0_5] : memref<8x64xf32, #tpu.memory_space<vmem>>, vector<8x64xf32>
    %cst_6 = arith.constant dense<0.000000e+00> : vector<64x64xf32>
    %5 = tpu.matmul %3, %4, %cst_6 {dimension_numbers = #tpu.dot_dimension_numbers<[1], [0], [0], [1], [0, 0, 1, 1], [], []>} : vector<64x8xf32>, vector<8x64xf32>, vector<64x64xf32> -> vector<64x64xf32>
    %c0_7 = arith.constant 0 : index
    %c0_8 = arith.constant 0 : index
    %c0_9 = arith.constant 0 : index
    %6 = vector.load %arg4[%c0_7, %c0_8, %c0_9] : memref<1x64x64xf32, #tpu.memory_space<vmem>>, vector<1x64x64xf32>
    %7 = vector.shape_cast %6 : vector<1x64x64xf32> to vector<64x64xf32>
    %8 = vector.shape_cast %5 : vector<64x64xf32> to vector<1x64x64xf32>
    tpu.vector_store %arg4[%c0_7, %c0_8, %c0_9], %8 {strides = array<i32>} : memref<1x64x64xf32, #tpu.memory_space<vmem>>, vector<1x64x64xf32>,
    return
  }
  func.func @transform_0(%arg0: i32) -> (i32, i32, i32) {
    %c0_i32 = arith.constant 0 : i32
    %c0_i32_0 = arith.constant 0 : i32
    %c0_i32_1 = arith.constant 0 : i32
    return %arg0, %c0_i32, %c0_i32_0 : i32, i32, i32
  }
  func.func @transform_1(%arg0: i32) -> (i32, i32) {
    %c0_i32 = arith.constant 0 : i32
    %c0_i32_0 = arith.constant 0 : i32
    %c0_i32_1 = arith.constant 0 : i32
    return %c0_i32, %c0_i32_0 : i32, i32
  }
  func.func @transform_2(%arg0: i32) -> (i32, i32) {
    %c0_i32 = arith.constant 0 : i32
    %c0_i32_0 = arith.constant 0 : i32
    %c0_i32_1 = arith.constant 0 : i32
    return %c0_i32, %c0_i32_0 : i32, i32
  }
  func.func @transform_3(%arg0: i32) -> (i32, i32, i32) {
    %c0_i32 = arith.constant 0 : i32
    %c0_i32_0 = arith.constant 0 : i32
    %c0_i32_1 = arith.constant 0 : i32
    return %arg0, %c0_i32, %c0_i32_0 : i32, i32, i32
  }
}

</mosaic_0001>

<llo_original>
// kernel: squeeze.5
$region0: #{squeeze.5}
  %s0 = inlined_call_operand.vmem [shape: f32[128], index: 0, kind: input, shape index: {}]
  %s1 = inlined_call_operand.vmem [shape: f32[2,8,8], index: 1, kind: output, shape index: {}]
  $region1: #{squeeze.5} parent=0
    #allocation0 [shape = 'u8[4096]{0}', space=vmem, size = 0x1000, scoped, tag = 'scoped mem for input reshape']
    %s3 = ssub.s32 2, 1
    %v4 = vld [vmem:[%s0] sm:%s3]
    %5 = vst [vmem:[#allocation0] sm:%s3] %v4
    %v6 = vld [vmem:[#allocation0] sm:$0x1]
    %vm7 = vcmask 64512
    %8 = vst.msk [vmem:[%s1] sm:$0x1] %vm7, %v6
    %v9 = vld [vmem:[#allocation0] sm:$0x1]
    %10 = vrot.lane.b32.xlu0 %v9, 120
    %v11 = vpop.permute.xlu0 %10
    %vm12 = vcmask 64512
    %s13 = scalar_lea.vmem %s1, 1
    %14 = vst.msk [vmem:[%s13] sm:$0x1] %vm12, %v11
    %v15 = vld [vmem:[#allocation0] sm:$0x1]
    %16 = vrot.lane.b32.xlu0 %v15, 112
    %v17 = vpop.permute.xlu0 %16
    %vm18 = vcmask 64512
    %s19 = scalar_lea.vmem %s1, 2
    %20 = vst.msk [vmem:[%s19] sm:$0x1] %vm18, %v17
    %v21 = vld [vmem:[#allocation0] sm:$0x1]
    %22 = vrot.lane.b32.xlu0 %v21, 104
    %v23 = vpop.permute.xlu0 %22
    %vm24 = vcmask 64512
    %s25 = scalar_lea.vmem %s1, 3
    %26 = vst.msk [vmem:[%s25] sm:$0x1] %vm24, %v23
    %v27 = vld [vmem:[#allocation0] sm:$0x1]
    %28 = vrot.lane.b32.xlu0 %v27, 96
    %v29 = vpop.permute.xlu0 %28
    %vm30 = vcmask 64512
    %s31 = scalar_lea.vmem %s1, 4
    %32 = vst.msk [vmem:[%s31] sm:$0x1] %vm30, %v29
    %v33 = vld [vmem:[#allocation0] sm:$0x1]
    %34 = vrot.lane.b32.xlu0 %v33, 88
    %v35 = vpop.permute.xlu0 %34
    %vm36 = vcmask 64512
    %s37 = scalar_lea.vmem %s1, 5
    %38 = vst.msk [vmem:[%s37] sm:$0x1] %vm36, %v35
    %v39 = vld [vmem:[#allocation0] sm:$0x1]
    %40 = vrot.lane.b32.xlu0 %v39, 80
    %v41 = vpop.permute.xlu0 %40
    %vm42 = vcmask 64512
    %s43 = scalar_lea.vmem %s1, 6
    %44 = vst.msk [vmem:[%s43] sm:$0x1] %vm42, %v41
    %v45 = vld [vmem:[#allocation0] sm:$0x1]
    %46 = vrot.lane.b32.xlu0 %v45, 72
    %v47 = vpop.permute.xlu0 %46
    %vm48 = vcmask 64512
    %s49 = scalar_lea.vmem %s1, 7
    %50 = vst.msk [vmem:[%s49] sm:$0x1] %vm48, %v47
    %v51 = vld [vmem:[#allocation0] sm:$0x1]
    %52 = vrot.lane.b32.xlu0 %v51, 64
    %v53 = vpop.permute.xlu0 %52
    %vm54 = vcmask 64512
    %s55 = scalar_lea.vmem %s1, 8
    %56 = vst.msk [vmem:[%s55] sm:$0x1] %vm54, %v53
    %v57 = vld [vmem:[#allocation0] sm:$0x1]
    %58 = vrot.lane.b32.xlu0 %v57, 56
    %v59 = vpop.permute.xlu0 %58
    %vm60 = vcmask 64512
    %s61 = scalar_lea.vmem %s1, 9
    %62 = vst.msk [vmem:[%s61] sm:$0x1] %vm60, %v59
    %v63 = vld [vmem:[#allocation0] sm:$0x1]
    %64 = vrot.lane.b32.xlu0 %v63, 48
    %v65 = vpop.permute.xlu0 %64
    %vm66 = vcmask 64512
    %s67 = scalar_lea.vmem %s1, 10
    %68 = vst.msk [vmem:[%s67] sm:$0x1] %vm66, %v65
    %v69 = vld [vmem:[#allocation0] sm:$0x1]
    %70 = vrot.lane.b32.xlu0 %v69, 40
    %v71 = vpop.permute.xlu0 %70
    %vm72 = vcmask 64512
    %s73 = scalar_lea.vmem %s1, 11
    %74 = vst.msk [vmem:[%s73] sm:$0x1] %vm72, %v71
    %v75 = vld [vmem:[#allocation0] sm:$0x1]
    %76 = vrot.lane.b32.xlu0 %v75, 32
    %v77 = vpop.permute.xlu0 %76
    %vm78 = vcmask 64512
    %s79 = scalar_lea.vmem %s1, 12
    %80 = vst.msk [vmem:[%s79] sm:$0x1] %vm78, %v77
    %v81 = vld [vmem:[#allocation0] sm:$0x1]
    %82 = vrot.lane.b32.xlu0 %v81, 24
    %v83 = vpop.permute.xlu0 %82
    %vm84 = vcmask 64512
    %s85 = scalar_lea.vmem %s1, 13
    %86 = vst.msk [vmem:[%s85] sm:$0x1] %vm84, %v83
    %v87 = vld [vmem:[#allocation0] sm:$0x1]
    %88 = vrot.lane.b32.xlu0 %v87, 16
    %v89 = vpop.permute.xlu0 %88
    %vm90 = vcmask 64512
    %s91 = scalar_lea.vmem %s1, 14
    %92 = vst.msk [vmem:[%s91] sm:$0x1] %vm90, %v89
    %v93 = vld [vmem:[#allocation0] sm:$0x1]
    %94 = vrot.lane.b32.xlu0 %v93, 8
    %v95 = vpop.permute.xlu0 %94
    %vm96 = vcmask 64512
    %s97 = scalar_lea.vmem %s1, 15
    %98 = vst.msk [vmem:[%s97] sm:$0x1] %vm96, %v95

// kernel: crad_forward.3
$region0: #{crad_forward.3}
  #allocation0 [shape = 'u32[]', space=smem, size = 0x4, offset = 0x4, fixed_abs, tag = 'smem constant byte address 0x4 - core index']
  #allocation1 [shape = 'u32[72,128]{1,0:T(1,128)}', space=vmem, size = 0x9000, scoped, tag = 'internal scratch']
  %s0 = inlined_call_operand.vmem [shape: f32[2,8,8], index: 0, kind: input, shape index: {}]
  %s1 = inlined_call_operand.vmem [shape: f32[64,8], index: 1, kind: input, shape index: {}]
  %s2 = inlined_call_operand.vmem [shape: f32[8,64], index: 2, kind: input, shape index: {}]
  %s3 = inlined_call_operand.hbm [shape: f32[2,64,64], index: 3, kind: output, shape index: {}]
  %s4 = sld [smem:[#allocation0]]
  $region45: #{crad_forward.3} parent=0
    _
  %s6 = ssub.s32 1, %s4
  %s7 = scalar_select 0, %s6, %s4
  $region1: #{crad_forward.3} parent=0
    #allocation2 [shape = 'u8[65536]{0}', space=vmem, size = 0x10000, scoped, tag = 'output window, operand 0']
    #allocation3 [shape = 's32[2]{0}', space=sflag, size = 0x8, scoped, tag = 'scoped memory for crad_forward.3']
    %8 = vsyncpa [#allocation3], 0
    %s9 = scalar_lea.sflag [#allocation3], 1
    %10 = vsyncpa %s9, 0
    loop: start=0, step=1, limit=4
    $region2: #{crad_forward.3} parent=1 // loop_pre_header
      _
    $region3: #{crad_forward.3} parent=1 // loop_header
      %s12 = sphi 0, %s16
      %p13 = scmp.ge.s32.totalorder %s12, 4
      %s22 = sphi 0, %s24
      %s25 = sphi 0, %s22
      %s26 = sphi 0, %s25
      %s42 = sphi 0, %s26
      %s46 = sphi 0, %s46
      %s48 = sphi 0, %s46
      %s49 = sphi 0, %s48
      %s63 = sphi 0, %s49
      %s67 = sphi 0, %s67
      %s69 = sphi 0, %s67
      %s70 = sphi 0, %s69
      %s84 = sphi 0, %s70
      %s90 = sphi 0, %s92
      %s93 = sphi 0, %s90
      %s94 = sphi 0, %s93
      %s110 = sphi 0, %s94
    $region4: #{crad_forward.3} parent=1 // loop_header_branch
      %15 = sbr.rel (%p13) target = $region8
    $region5: #{crad_forward.3} parent=1 // loop_body
      %s17 = ssub.s32 %s12, 1
      %s18 = ssub.s32 %s12, 2
      %s19 = sadd.s32 %s12, 1
      %s20 = ssub.s32 %s12, %s19
      %p21 = scmp.eq.s32.totalorder %s20, 0
      %s23 = sadd.s32 %s22, 1
      %s24 = scalar_select %p21, %s22, %s23
      %p27 = pneg %p21
      %p28 = scmp.eq.s32.totalorder %s12, 1
      %p29 = por %p27, %p28
      %p30 = scmp.ne.s32.totalorder %s22, %s25
      %p31 = scmp.eq.s32.totalorder %s12, 0
      %p32 = por %p30, %p31
      %p33 = scmp.ne.s32.totalorder %s22, %s25
      %p34 = scmp.eq.s32.totalorder %s17, 1
      %p35 = por %p33, %p34
      %p36 = scmp.ne.s32.totalorder %s25, %s26
      %p37 = scmp.eq.s32.totalorder %s17, 0
      %p38 = por %p36, %p37
      %p39 = scmp.ne.s32.totalorder %s25, %s26
      %p40 = scmp.eq.s32.totalorder %s18, 1
      %p41 = por %p39, %p40
      %p43 = scmp.ne.s32.totalorder %s26, %s42
      %p44 = scmp.eq.s32.totalorder %s18, 0
      %p45 = por %p43, %p44
      %s47 = sadd.s32 %s46, 1
      %p50 = scmp.eq.s32.totalorder %s12, 1
      %p51 = scmp.ne.s32.totalorder %s46, %s48
      %p52 = scmp.eq.s32.totalorder %s12, 0
      %p53 = por %p51, %p52
      %p54 = scmp.ne.s32.totalorder %s46, %s48
      %p55 = scmp.eq.s32.totalorder %s17, 1
      %p56 = por %p54, %p55
      %p57 = scmp.ne.s32.totalorder %s48, %s49
      %p58 = scmp.eq.s32.totalorder %s17, 0
      %p59 = por %p57, %p58
      %p60 = scmp.ne.s32.totalorder %s48, %s49
      %p61 = scmp.eq.s32.totalorder %s18, 1
      %p62 = por %p60, %p61
      %p64 = scmp.ne.s32.totalorder %s49, %s63
      %p65 = scmp.eq.s32.totalorder %s18, 0
      %p66 = por %p64, %p65
      %s68 = sadd.s32 %s67, 1
      %p71 = scmp.eq.s32.totalorder %s12, 1
      %p72 = scmp.ne.s32.totalorder %s67, %s69
      %p73 = scmp.eq.s32.totalorder %s12, 0
      %p74 = por %p72, %p73
      %p75 = scmp.ne.s32.totalorder %s67, %s69
      %p76 = scmp.eq.s32.totalorder %s17, 1
      %p77 = por %p75, %p76
      %p78 = scmp.ne.s32.totalorder %s69, %s70
      %p79 = scmp.eq.s32.totalorder %s17, 0
      %p80 = por %p78, %p79
      %p81 = scmp.ne.s32.totalorder %s69, %s70
      %p82 = scmp.eq.s32.totalorder %s18, 1
      %p83 = por %p81, %p82
      %p85 = scmp.ne.s32.totalorder %s70, %s84
      %p86 = scmp.eq.s32.totalorder %s18, 0
      %p87 = por %p85, %p86
      %s88 = ssub.s32 %s12, %s19
      %p89 = scmp.eq.s32.totalorder %s88, 0
      %s91 = sadd.s32 %s90, 1
      %s92 = scalar_select %p89, %s90, %s91
      %p95 = pneg %p89
      %p96 = scmp.eq.s32.totalorder %s12, 1
      %p97 = por %p95, %p96
      %p98 = scmp.ne.s32.totalorder %s90, %s93
      %p99 = scmp.eq.s32.totalorder %s12, 0
      %p100 = por %p98, %p99
      %p101 = scmp.ne.s32.totalorder %s90, %s93
      %p102 = scmp.eq.s32.totalorder %s17, 1
      %p103 = por %p101, %p102
      %p104 = scmp.ne.s32.totalorder %s93, %s94
      %p105 = scmp.eq.s32.totalorder %s17, 0
      %p106 = por %p104, %p105
      %p107 = scmp.ne.s32.totalorder %s93, %s94
      %p108 = scmp.eq.s32.totalorder %s18, 1
      %p109 = por %p107, %p108
      %p111 = scmp.ne.s32.totalorder %s94, %s110
      %p112 = scmp.eq.s32.totalorder %s18, 0
      %p113 = por %p111, %p112
      %p114 = scmp.le.s32.totalorder 1, %s12
      %p115 = scmp.lt.s32.totalorder %s12, 3
      %p116 = pnand %p114, %p115
      %p117 = pneg %p116
      // Predicated region
      $region9: #{crad_forward.3} parent=5 // pred_check
        _
      $region10: #{crad_forward.3} parent=5 // pred_check_branch
        %119 = sbr.rel (%p116) target = $region12
      $region11: #{crad_forward.3} parent=5 // pred_region
        %s120 = ssub.s32 %s12, 1
        // Predicated region
        $region13: #{crad_forward.3} parent=11 // pred_check
          %p121 = pneg %p59
        $region14: #{crad_forward.3} parent=11 // pred_check_branch
          %123 = sbr.rel (%p121) target = $region16
        $region15: #{crad_forward.3} parent=11 // pred_region
          _
        $region16: #{crad_forward.3} parent=11 // pred_fallthru
          _
        // Predicated region
        $region17: #{crad_forward.3} parent=11 // pred_check
          %p124 = pneg %p80
        $region18: #{crad_forward.3} parent=11 // pred_check_branch
          %126 = sbr.rel (%p124) target = $region20
        $region19: #{crad_forward.3} parent=11 // pred_region
          _
        $region20: #{crad_forward.3} parent=11 // pred_fallthru
          _
      $region12: #{crad_forward.3} parent=5 // pred_fallthru
        _
      %p127 = scmp.lt.s32.totalorder %s12, 2
      // Predicated region
      $region21: #{crad_forward.3} parent=5 // pred_check
        %p128 = pneg %p127
      $region22: #{crad_forward.3} parent=5 // pred_check_branch
        %130 = sbr.rel (%p128) target = $region24
      $region23: #{crad_forward.3} parent=5 // pred_region
        // Predicated region
        $region25: #{crad_forward.3} parent=23 // pred_check
          %p131 = pneg %p32
        $region26: #{crad_forward.3} parent=23 // pred_check_branch
          %133 = sbr.rel (%p131) target = $region28
        $region27: #{crad_forward.3} parent=23 // pred_region
          %p134 = scmp.lt.s32.totalorder %s12, 1
          %s135 = scalar_select %p134, %s12, 1
          %s136 = smul.addr %s135, 8
          %s137 = scalar_lea.vmem %s0, %s136
        $region28: #{crad_forward.3} parent=23 // pred_fallthru
          _
      $region24: #{crad_forward.3} parent=5 // pred_fallthru
        _
      %p138 = scmp.le.s32.totalorder 1, %s12
      %p139 = scmp.lt.s32.totalorder %s12, 3
      %p140 = pnand %p138, %p139
      %p141 = pneg %p140
      // Predicated region
      $region29: #{crad_forward.3} parent=5 // pred_check
        _
      $region30: #{crad_forward.3} parent=5 // pred_check_branch
        %143 = sbr.rel (%p140) target = $region32
      $region31: #{crad_forward.3} parent=5 // pred_region
        %s144 = ssub.s32 %s12, 1
        %p145 = scmp.lt.s32.totalorder %s17, 1
        %s146 = scalar_select %p145, %s17, 1
        %s147 = smul.addr %s146, 8
        %s148 = scalar_lea.vmem %s0, %s147
        %p149 = pneg %p38
        %p150 = pneg %p35
        %p151 = pneg %p59
        %p152 = pneg %p56
        %p153 = pneg %p80
        %p154 = pneg %p77
        %p155 = pneg %p106
        %p156 = pneg %p103
        %s157 = sand.u32 %s93, 1
        %s158 = scalar_lea.sflag [#allocation3], %s157
        %s159 = sand.u32 %s93, 1
        %s160 = smul.addr %s159, 64
        %s161 = scalar_lea.vmem [#allocation2], %s160
        %p162 = scmp.lt.s32.totalorder %s17, 1
        %s163 = scalar_select %p162, %s17, 1
        %s164 = smul.addr %s163, 8
        %s165 = scalar_lea.vmem %s0, %s164
        %v166 = vld [vmem:[%s1] sm:$0xff]
        %v167 = vld [vmem:[%s1 + $0x8] sm:$0xff]
        %v168 = vld [vmem:[%s1 + $0x10] sm:$0xff]
        %v169 = vld [vmem:[%s1 + $0x18] sm:$0xff]
        %v170 = vld [vmem:[%s1 + $0x20] sm:$0xff]
        %v171 = vld [vmem:[%s1 + $0x28] sm:$0xff]
        %v172 = vld [vmem:[%s1 + $0x30] sm:$0xff]
        %v173 = vld [vmem:[%s1 + $0x38] sm:$0xff]
        %v174 = vld [vmem:[%s165] sm:$0xff]
        %vm175 = vcmask 64512
        %v177 = vsel %vm175, %v166, 0
        %v180 = vsel %vm175, %v167, 0
        %v183 = vsel %vm175, %v168, 0
        %v186 = vsel %vm175, %v169, 0
        %v189 = vsel %vm175, %v170, 0
        %v192 = vsel %vm175, %v171, 0
        %v195 = vsel %vm175, %v172, 0
        %v198 = vsel %vm175, %v173, 0
        %200 = vmatpush.msra.mxu0 0.0
        %201 = vmatpush.msra.mxu0 0.0
        %202 = vmatpush.msra.mxu0 0.0
        %203 = vmatpush.msra.mxu0 0.0
        %204 = vmatpush.msra.mxu0 0.0
        %205 = vmatpush.msra.mxu0 0.0
        %206 = vmatpush.msra.mxu0 0.0
        %207 = vmatpush.msra.mxu0 0.0
        %208 = vmatpush.msra.mxu0 0.0
        %209 = vmatpush.msra.mxu0 0.0
        %210 = vmatpush.msra.mxu0 0.0
        %211 = vmatpush.msra.mxu0 0.0
        %212 = vmatpush.msra.mxu0 0.0
        %213 = vmatpush.msra.mxu0 0.0
        %214 = vmatpush.msra.mxu0 0.0
        %215 = vmatpush.msra.mxu0 %v174
        %216 = vmatmul.f32.gmra.mxu0 %v177
        %v217 = vpop.f32.mrf.mxu0
        %v218 = vadd.f32 0.0, %v217
        %219 = vmatmul.f32.gmra.mxu0 %v180
        %v220 = vpop.f32.mrf.mxu0
        %v221 = vadd.f32 0.0, %v220
        %222 = vmatmul.f32.gmra.mxu0 %v183
        %v223 = vpop.f32.mrf.mxu0
        %v224 = vadd.f32 0.0, %v223
        %225 = vmatmul.f32.gmra.mxu0 %v186
        %v226 = vpop.f32.mrf.mxu0
        %v227 = vadd.f32 0.0, %v226
        %228 = vmatmul.f32.gmra.mxu0 %v189
        %v229 = vpop.f32.mrf.mxu0
        %v230 = vadd.f32 0.0, %v229
        %231 = vmatmul.f32.gmra.mxu0 %v192
        %v232 = vpop.f32.mrf.mxu0
        %v233 = vadd.f32 0.0, %v232
        %234 = vmatmul.f32.gmra.mxu0 %v195
        %v235 = vpop.f32.mrf.mxu0
        %v236 = vadd.f32 0.0, %v235
        %237 = vmatmul.f32.gmra.mxu0 %v198
        %v238 = vpop.f32.mrf.mxu0
        %v239 = vadd.f32 0.0, %v238
        %240 = vdwg.mxu0
        %v241 = vld [vmem:[%s2] sm:$0xff]
        %v243 = vsel %vm175, %v218, 0
        %v246 = vsel %vm175, %v221, 0
        %v249 = vsel %vm175, %v224, 0
        %v252 = vsel %vm175, %v227, 0
        %v255 = vsel %vm175, %v230, 0
        %v258 = vsel %vm175, %v233, 0
        %v261 = vsel %vm175, %v236, 0
        %v264 = vsel %vm175, %v239, 0
        %266 = vmatpush.msra.mxu0 0.0
        %267 = vmatpush.msra.mxu0 0.0
        %268 = vmatpush.msra.mxu0 0.0
        %269 = vmatpush.msra.mxu0 0.0
        %270 = vmatpush.msra.mxu0 0.0
        %271 = vmatpush.msra.mxu0 0.0
        %272 = vmatpush.msra.mxu0 0.0
        %273 = vmatpush.msra.mxu0 0.0
        %274 = vmatpush.msra.mxu0 0.0
        %275 = vmatpush.msra.mxu0 0.0
        %276 = vmatpush.msra.mxu0 0.0
        %277 = vmatpush.msra.mxu0 0.0
        %278 = vmatpush.msra.mxu0 0.0
        %279 = vmatpush.msra.mxu0 0.0
        %280 = vmatpush.msra.mxu0 0.0
        %281 = vmatpush.msra.mxu0 %v241
        %282 = vmatmul.f32.gmra.mxu0 %v243
        %v283 = vpop.f32.mrf.mxu0
        %v284 = vadd.f32 0.0, %v283
        %285 = vmatmul.f32.gmra.mxu0 %v246
        %v286 = vpop.f32.mrf.mxu0
        %v287 = vadd.f32 0.0, %v286
        %288 = vmatmul.f32.gmra.mxu0 %v249
        %v289 = vpop.f32.mrf.mxu0
        %v290 = vadd.f32 0.0, %v289
        %291 = vmatmul.f32.gmra.mxu0 %v252
        %v292 = vpop.f32.mrf.mxu0
        %v293 = vadd.f32 0.0, %v292
        %294 = vmatmul.f32.gmra.mxu0 %v255
        %v295 = vpop.f32.mrf.mxu0
        %v296 = vadd.f32 0.0, %v295
        %297 = vmatmul.f32.gmra.mxu0 %v258
        %v298 = vpop.f32.mrf.mxu0
        %v299 = vadd.f32 0.0, %v298
        %300 = vmatmul.f32.gmra.mxu0 %v261
        %v301 = vpop.f32.mrf.mxu0
        %v302 = vadd.f32 0.0, %v301
        %303 = vmatmul.f32.gmra.mxu0 %v264
        %v304 = vpop.f32.mrf.mxu0
        %v305 = vadd.f32 0.0, %v304
        %306 = vdwg.mxu0
        %vm307 = vcmask 523264
        %308 = vst.msk [vmem:[%s161] sm:$0xff] %vm307, %v284
        %309 = vst.msk [vmem:[%s161 + $0x8] sm:$0xff] %vm307, %v287
        %310 = vst.msk [vmem:[%s161 + $0x10] sm:$0xff] %vm307, %v290
        %311 = vst.msk [vmem:[%s161 + $0x18] sm:$0xff] %vm307, %v293
        %312 = vst.msk [vmem:[%s161 + $0x20] sm:$0xff] %vm307, %v296
        %313 = vst.msk [vmem:[%s161 + $0x28] sm:$0xff] %vm307, %v299
        %314 = vst.msk [vmem:[%s161 + $0x30] sm:$0xff] %vm307, %v302
        %315 = vst.msk [vmem:[%s161 + $0x38] sm:$0xff] %vm307, %v305
        %s316 = sand.u32 %s93, 1
        %s317 = scalar_lea.sflag [#allocation3], %s316
        %s318 = sand.u32 %s93, 1
        %s319 = smul.addr %s318, 64
        %s320 = scalar_lea.vmem [#allocation2], %s319
        // Predicated region
        $region33: #{crad_forward.3} parent=31 // pred_check
          %p321 = pneg %p103
        $region34: #{crad_forward.3} parent=31 // pred_check_branch
          %323 = sbr.rel (%p321) target = $region36
        $region35: #{crad_forward.3} parent=31 // pred_region
          %325 = vsyncadd %s317, 0
          %s326 = smul.addr %s17, 8
          %s327 = smul.addr %s326, 8
          %s328 = scalar_lea.hbm %s3, %s327
          %s329 = sshll.u32 %s320, 4
          %s330 = int_to_ptr.vmem [resolvable:$true] %s329
          %s331 = sshll.u32 %s328, 4
          %s332 = int_to_ptr.hbm [resolvable:$true] %s331
          %337 = dma.vmem_to_hbm [thread:$0]  %s330, 1024, %s332, %s317, 128, 128, 8
        $region36: #{crad_forward.3} parent=31 // pred_fallthru
          _
      $region32: #{crad_forward.3} parent=5 // pred_fallthru
        _
      %p338 = scmp.le.s32.totalorder 2, %s12
      // Predicated region
      $region37: #{crad_forward.3} parent=5 // pred_check
        %p339 = pneg %p338
      $region38: #{crad_forward.3} parent=5 // pred_check_branch
        %341 = sbr.rel (%p339) target = $region40
      $region39: #{crad_forward.3} parent=5 // pred_region
        %s342 = ssub.s32 %s12, 2
        // Predicated region
        $region41: #{crad_forward.3} parent=39 // pred_check
          %p343 = pneg %p109
        $region42: #{crad_forward.3} parent=39 // pred_check_branch
          %345 = sbr.rel (%p343) target = $region44
        $region43: #{crad_forward.3} parent=39 // pred_region
          %s346 = sand.u32 %s94, 1
          %s347 = scalar_lea.sflag [#allocation3], %s346
          %s348 = sand.u32 %s94, 1
          %s349 = smul.addr %s348, 64
          %s350 = scalar_lea.vmem [#allocation2], %s349
          %352 = dma.done %s347, 1024
        $region44: #{crad_forward.3} parent=39 // pred_fallthru
          _
      $region40: #{crad_forward.3} parent=5 // pred_fallthru
        _
    $region6: #{crad_forward.3} parent=1 // loop_footer
      %s16 = sadd.s32 1, %s12
    $region7: #{crad_forward.3} parent=1 // loop_footer_branch
      %11 = sbr.rel target = $region3
    $region8: #{crad_forward.3} parent=1 // loop_exit
      _
    %353 = vsyncpa [#allocation3], 1
    %s354 = scalar_lea.sflag [#allocation3], 1
    %355 = vsyncpa %s354, 1

// kernel: crad_forward.2
$region0: #{crad_forward.2}
  #allocation0 [shape = 'u32[]', space=smem, size = 0x4, offset = 0x4, fixed_abs, tag = 'smem constant byte address 0x4 - core index']
  #allocation1 [shape = 'u32[72,128]{1,0:T(1,128)}', space=vmem, size = 0x9000, scoped, tag = 'internal scratch']
  %s0 = inlined_call_operand.vmem [shape: f32[128,16], index: 0, kind: input, shape index: {}]
  %s1 = inlined_call_operand.vmem [shape: bf16[128,16], index: 1, kind: input, shape index: {}]
  %s2 = inlined_call_operand.vmem [shape: bf16[16,16], index: 2, kind: input, shape index: {}]
  %s3 = inlined_call_operand.vmem [shape: f32[1,16], index: 3, kind: input, shape index: {}]
  %s4 = inlined_call_operand.vmem [shape: bf16[16,2], index: 4, kind: input, shape index: {}]
  %s5 = inlined_call_operand.vmem [shape: f32[1,2], index: 5, kind: input, shape index: {}]
  %s6 = inlined_call_operand.vmem [shape: bf16[16,16], index: 6, kind: input, shape index: {}]
  %s7 = inlined_call_operand.hbm [shape: f32[128,16], index: 7, kind: output, shape index: {0}]
  %s8 = inlined_call_operand.vmem [shape: f32[1,128], index: 8, kind: output, shape index: {1}]
  %9 = xla_tuple %s7, %s8
  %s10 = sld [smem:[#allocation0]]
  $region46: #{crad_forward.2} parent=0
    _
  %s12 = ssub.s32 1, %s10
  %s13 = scalar_select 0, %s12, %s10
  $region1: #{crad_forward.2} parent=0
    #allocation2 [shape = 'u8[65536]{0}', space=vmem, size = 0x10000, scoped, tag = 'output window, operand 0, single buffered']
    #allocation3 [shape = 's32[1]{0}', space=sflag, size = 0x4, scoped, tag = 'scoped memory for crad_forward.2']
    %14 = vsyncpa [#allocation3], 0
    // Predicated region
    $region2: #{crad_forward.2} parent=1 // pred_check
      _
    $region3: #{crad_forward.2} parent=1 // pred_check_branch
      %16 = sbr.rel (0) target = $region5
    $region4: #{crad_forward.2} parent=1 // pred_region
      _
    $region5: #{crad_forward.2} parent=1 // pred_fallthru
      _
    // Predicated region
    $region6: #{crad_forward.2} parent=1 // pred_check
      _
    $region7: #{crad_forward.2} parent=1 // pred_check_branch
      %18 = sbr.rel (0) target = $region9
    $region8: #{crad_forward.2} parent=1 // pred_region
      _
    $region9: #{crad_forward.2} parent=1 // pred_fallthru
      _
    // Predicated region
    $region10: #{crad_forward.2} parent=1 // pred_check
      _
    $region11: #{crad_forward.2} parent=1 // pred_check_branch
      %20 = sbr.rel (0) target = $region13
    $region12: #{crad_forward.2} parent=1 // pred_region
      _
    $region13: #{crad_forward.2} parent=1 // pred_fallthru
      _
    // Predicated region
    $region14: #{crad_forward.2} parent=1 // pred_check
      _
    $region15: #{crad_forward.2} parent=1 // pred_check_branch
      %22 = sbr.rel (0) target = $region17
    $region16: #{crad_forward.2} parent=1 // pred_region
      _
    $region17: #{crad_forward.2} parent=1 // pred_fallthru
      _
    // Predicated region
    $region18: #{crad_forward.2} parent=1 // pred_check
      _
    $region19: #{crad_forward.2} parent=1 // pred_check_branch
      %24 = sbr.rel (0) target = $region21
    $region20: #{crad_forward.2} parent=1 // pred_region
      _
    $region21: #{crad_forward.2} parent=1 // pred_fallthru
      _
    // Predicated region
    $region22: #{crad_forward.2} parent=1 // pred_check
      _
    $region23: #{crad_forward.2} parent=1 // pred_check_branch
      %26 = sbr.rel (0) target = $region25
    $region24: #{crad_forward.2} parent=1 // pred_region
      _
    $region25: #{crad_forward.2} parent=1 // pred_fallthru
      _
    // Predicated region
    $region26: #{crad_forward.2} parent=1 // pred_check
      _
    $region27: #{crad_forward.2} parent=1 // pred_check_branch
      %28 = sbr.rel (0) target = $region29
    $region28: #{crad_forward.2} parent=1 // pred_region
      _
    $region29: #{crad_forward.2} parent=1 // pred_fallthru
      _
    %v30 = vld [vmem:[%s0] sm:$0xff]
    %v31 = vld [vmem:[%s0 + $0x8] sm:$0xff]
    %v32 = vld [vmem:[%s0 + $0x10] sm:$0xff]
    %v33 = vld [vmem:[%s0 + $0x18] sm:$0xff]
    %v34 = vld [vmem:[%s0 + $0x20] sm:$0xff]
    %v35 = vld [vmem:[%s0 + $0x28] sm:$0xff]
    %v36 = vld [vmem:[%s0 + $0x30] sm:$0xff]
    %v37 = vld [vmem:[%s0 + $0x38] sm:$0xff]
    %v38 = vld [vmem:[%s0 + $0x40] sm:$0xff]
    %v39 = vld [vmem:[%s0 + $0x48] sm:$0xff]
    %v40 = vld [vmem:[%s0 + $0x50] sm:$0xff]
    %v41 = vld [vmem:[%s0 + $0x58] sm:$0xff]
    %v42 = vld [vmem:[%s0 + $0x60] sm:$0xff]
    %v43 = vld [vmem:[%s0 + $0x68] sm:$0xff]
    %v44 = vld [vmem:[%s0 + $0x70] sm:$0xff]
    %v45 = vld [vmem:[%s0 + $0x78] sm:$0xff]
    %v46 = vpack.c.bf16 %v31, %v30
    %v47 = vpack.c.bf16 %v33, %v32
    %v48 = vpack.c.bf16 %v35, %v34
    %v49 = vpack.c.bf16 %v37, %v36
    %v50 = vpack.c.bf16 %v39, %v38
    %v51 = vpack.c.bf16 %v41, %v40
    %v52 = vpack.c.bf16 %v43, %v42
    %v53 = vpack.c.bf16 %v45, %v44
    %v54 = vld [vmem:[%s2] sm:$0xf]
    %v55 = vld [vmem:[%s2 + $0x4] sm:$0xf]
    %v56 = vld [vmem:[%s3] sm:$0x1]
    %v58 = vperm.slane %v56, 0
    %v62 = vunpack.c.l.b16 %v54
    %v63 = vunpack.c.l.b16 %v55
    %v64 = vpack.c.b16 %v63, %v62
    %vm66 = vcmask 130048
    %v68 = vsel %vm66, %v46, 0
    %v71 = vsel %vm66, %v47, 0
    %v74 = vsel %vm66, %v48, 0
    %v77 = vsel %vm66, %v49, 0
    %v80 = vsel %vm66, %v50, 0
    %v83 = vsel %vm66, %v51, 0
    %v86 = vsel %vm66, %v52, 0
    %v89 = vsel %vm66, %v53, 0
    %91 = vmatpush.bf16.msra.mxu0 0
    %92 = vmatpush.bf16.msra.mxu0 0
    %93 = vmatpush.bf16.msra.mxu0 0
    %94 = vmatpush.bf16.msra.mxu0 0
    %95 = vmatpush.bf16.msra.mxu0 0
    %96 = vmatpush.bf16.msra.mxu0 0
    %97 = vmatpush.bf16.msra.mxu0 0
    %98 = vmatpush.bf16.msra.mxu0 %v64
    %99 = vmatmul.bf16.gmra.mxu0 %v68
    %v100 = vpop.f32.mrf.mxu0
    %v101 = vadd.f32 %v58, %v100
    %v102 = vpop.f32.mrf.mxu0
    %v103 = vadd.f32 %v58, %v102
    %104 = vmatmul.bf16.gmra.mxu0 %v71
    %v105 = vpop.f32.mrf.mxu0
    %v106 = vadd.f32 %v58, %v105
    %v107 = vpop.f32.mrf.mxu0
    %v108 = vadd.f32 %v58, %v107
    %109 = vmatmul.bf16.gmra.mxu0 %v74
    %v110 = vpop.f32.mrf.mxu0
    %v111 = vadd.f32 %v58, %v110
    %v112 = vpop.f32.mrf.mxu0
    %v113 = vadd.f32 %v58, %v112
    %114 = vmatmul.bf16.gmra.mxu0 %v77
    %v115 = vpop.f32.mrf.mxu0
    %v116 = vadd.f32 %v58, %v115
    %v117 = vpop.f32.mrf.mxu0
    %v118 = vadd.f32 %v58, %v117
    %119 = vmatmul.bf16.gmra.mxu0 %v80
    %v120 = vpop.f32.mrf.mxu0
    %v121 = vadd.f32 %v58, %v120
    %v122 = vpop.f32.mrf.mxu0
    %v123 = vadd.f32 %v58, %v122
    %124 = vmatmul.bf16.gmra.mxu0 %v83
    %v125 = vpop.f32.mrf.mxu0
    %v126 = vadd.f32 %v58, %v125
    %v127 = vpop.f32.mrf.mxu0
    %v128 = vadd.f32 %v58, %v127
    %129 = vmatmul.bf16.gmra.mxu0 %v86
    %v130 = vpop.f32.mrf.mxu0
    %v131 = vadd.f32 %v58, %v130
    %v132 = vpop.f32.mrf.mxu0
    %v133 = vadd.f32 %v58, %v132
    %134 = vmatmul.bf16.gmra.mxu0 %v89
    %v135 = vpop.f32.mrf.mxu0
    %v136 = vadd.f32 %v58, %v135
    %v137 = vpop.f32.mrf.mxu0
    %v138 = vadd.f32 %v58, %v137
    %139 = vdwg.mxu0
    %v140 = vtanh.pop %v101
    %v141 = vtanh.pop %v103
    %v142 = vtanh.pop %v106
    %v143 = vtanh.pop %v108
    %v144 = vtanh.pop %v111
    %v145 = vtanh.pop %v113
    %v146 = vtanh.pop %v116
    %v147 = vtanh.pop %v118
    %v148 = vtanh.pop %v121
    %v149 = vtanh.pop %v123
    %v150 = vtanh.pop %v126
    %v151 = vtanh.pop %v128
    %v152 = vtanh.pop %v131
    %v153 = vtanh.pop %v133
    %v154 = vtanh.pop %v136
    %v155 = vtanh.pop %v138
    %v156 = vpack.c.bf16 %v141, %v140
    %v157 = vpack.c.bf16 %v143, %v142
    %v158 = vpack.c.bf16 %v145, %v144
    %v159 = vpack.c.bf16 %v147, %v146
    %v160 = vpack.c.bf16 %v149, %v148
    %v161 = vpack.c.bf16 %v151, %v150
    %v162 = vpack.c.bf16 %v153, %v152
    %v163 = vpack.c.bf16 %v155, %v154
    %v164 = vld [vmem:[%s4] sm:$0xf]
    %v165 = vld [vmem:[%s4 + $0x4] sm:$0xf]
    %v166 = vld [vmem:[%s5] sm:$0x1]
    %v168 = vperm.slane %v166, 0
    %v172 = vunpack.c.l.b16 %v164
    %v173 = vunpack.c.l.b16 %v165
    %v174 = vpack.c.b16 %v173, %v172
    %v177 = vsel %vm66, %v156, 0
    %v180 = vsel %vm66, %v157, 0
    %v183 = vsel %vm66, %v158, 0
    %v186 = vsel %vm66, %v159, 0
    %v189 = vsel %vm66, %v160, 0
    %v192 = vsel %vm66, %v161, 0
    %v195 = vsel %vm66, %v162, 0
    %v198 = vsel %vm66, %v163, 0
    %200 = vmatpush.bf16.msra.mxu0 0
    %201 = vmatpush.bf16.msra.mxu0 0
    %202 = vmatpush.bf16.msra.mxu0 0
    %203 = vmatpush.bf16.msra.mxu0 0
    %204 = vmatpush.bf16.msra.mxu0 0
    %205 = vmatpush.bf16.msra.mxu0 0
    %206 = vmatpush.bf16.msra.mxu0 0
    %207 = vmatpush.bf16.msra.mxu0 %v174
    %208 = vmatmul.bf16.gmra.mxu0 %v177
    %v209 = vpop.f32.mrf.mxu0
    %v210 = vadd.f32 %v168, %v209
    %v211 = vpop.f32.mrf.mxu0
    %v212 = vadd.f32 %v168, %v211
    %213 = vmatmul.bf16.gmra.mxu0 %v180
    %v214 = vpop.f32.mrf.mxu0
    %v215 = vadd.f32 %v168, %v214
    %v216 = vpop.f32.mrf.mxu0
    %v217 = vadd.f32 %v168, %v216
    %218 = vmatmul.bf16.gmra.mxu0 %v183
    %v219 = vpop.f32.mrf.mxu0
    %v220 = vadd.f32 %v168, %v219
    %v221 = vpop.f32.mrf.mxu0
    %v222 = vadd.f32 %v168, %v221
    %223 = vmatmul.bf16.gmra.mxu0 %v186
    %v224 = vpop.f32.mrf.mxu0
    %v225 = vadd.f32 %v168, %v224
    %v226 = vpop.f32.mrf.mxu0
    %v227 = vadd.f32 %v168, %v226
    %228 = vmatmul.bf16.gmra.mxu0 %v189
    %v229 = vpop.f32.mrf.mxu0
    %v230 = vadd.f32 %v168, %v229
    %v231 = vpop.f32.mrf.mxu0
    %v232 = vadd.f32 %v168, %v231
    %233 = vmatmul.bf16.gmra.mxu0 %v192
    %v234 = vpop.f32.mrf.mxu0
    %v235 = vadd.f32 %v168, %v234
    %v236 = vpop.f32.mrf.mxu0
    %v237 = vadd.f32 %v168, %v236
    %238 = vmatmul.bf16.gmra.mxu0 %v195
    %v239 = vpop.f32.mrf.mxu0
    %v240 = vadd.f32 %v168, %v239
    %v241 = vpop.f32.mrf.mxu0
    %v242 = vadd.f32 %v168, %v241
    %243 = vmatmul.bf16.gmra.mxu0 %v198
    %v244 = vpop.f32.mrf.mxu0
    %v245 = vadd.f32 %v168, %v244
    %v246 = vpop.f32.mrf.mxu0
    %v247 = vadd.f32 %v168, %v246
    %248 = vdwg.mxu0
    %v249 = vtanh.pop %v210
    %v250 = vtanh.pop %v212
    %v251 = vtanh.pop %v215
    %v252 = vtanh.pop %v217
    %v253 = vtanh.pop %v220
    %v254 = vtanh.pop %v222
    %v255 = vtanh.pop %v225
    %v256 = vtanh.pop %v227
    %v257 = vtanh.pop %v230
    %v258 = vtanh.pop %v232
    %v259 = vtanh.pop %v235
    %v260 = vtanh.pop %v237
    %v261 = vtanh.pop %v240
    %v262 = vtanh.pop %v242
    %v263 = vtanh.pop %v245
    %v264 = vtanh.pop %v247
    %v265 = vadd.f32 %v249, 1.0
    %v266 = vadd.f32 %v250, 1.0
    %v267 = vadd.f32 %v251, 1.0
    %v268 = vadd.f32 %v252, 1.0
    %v269 = vadd.f32 %v253, 1.0
    %v270 = vadd.f32 %v254, 1.0
    %v271 = vadd.f32 %v255, 1.0
    %v272 = vadd.f32 %v256, 1.0
    %v273 = vadd.f32 %v257, 1.0
    %v274 = vadd.f32 %v258, 1.0
    %v275 = vadd.f32 %v259, 1.0
    %v276 = vadd.f32 %v260, 1.0
    %v277 = vadd.f32 %v261, 1.0
    %v278 = vadd.f32 %v262, 1.0
    %v279 = vadd.f32 %v263, 1.0
    %v280 = vadd.f32 %v264, 1.0
    %v281 = vmul.f32 %v265, 4.0
    %v282 = vmul.f32 %v266, 4.0
    %v283 = vmul.f32 %v267, 4.0
    %v284 = vmul.f32 %v268, 4.0
    %v285 = vmul.f32 %v269, 4.0
    %v286 = vmul.f32 %v270, 4.0
    %v287 = vmul.f32 %v271, 4.0
    %v288 = vmul.f32 %v272, 4.0
    %v289 = vmul.f32 %v273, 4.0
    %v290 = vmul.f32 %v274, 4.0
    %v291 = vmul.f32 %v275, 4.0
    %v292 = vmul.f32 %v276, 4.0
    %v293 = vmul.f32 %v277, 4.0
    %v294 = vmul.f32 %v278, 4.0
    %v295 = vmul.f32 %v279, 4.0
    %v296 = vmul.f32 %v280, 4.0
    %v297 = vsub.f32 %v281, 1.0
    %v298 = vsub.f32 %v282, 1.0
    %v299 = vsub.f32 %v283, 1.0
    %v300 = vsub.f32 %v284, 1.0
    %v301 = vsub.f32 %v285, 1.0
    %v302 = vsub.f32 %v286, 1.0
    %v303 = vsub.f32 %v287, 1.0
    %v304 = vsub.f32 %v288, 1.0
    %v305 = vsub.f32 %v289, 1.0
    %v306 = vsub.f32 %v290, 1.0
    %v307 = vsub.f32 %v291, 1.0
    %v308 = vsub.f32 %v292, 1.0
    %v309 = vsub.f32 %v293, 1.0
    %v310 = vsub.f32 %v294, 1.0
    %v311 = vsub.f32 %v295, 1.0
    %v312 = vsub.f32 %v296, 1.0
    %v313 = vmul.f32 %v297, 0.5
    %v314 = vmul.f32 %v298, 0.5
    %v315 = vmul.f32 %v299, 0.5
    %v316 = vmul.f32 %v300, 0.5
    %v317 = vmul.f32 %v301, 0.5
    %v318 = vmul.f32 %v302, 0.5
    %v319 = vmul.f32 %v303, 0.5
    %v320 = vmul.f32 %v304, 0.5
    %v321 = vmul.f32 %v305, 0.5
    %v322 = vmul.f32 %v306, 0.5
    %v323 = vmul.f32 %v307, 0.5
    %v324 = vmul.f32 %v308, 0.5
    %v325 = vmul.f32 %v309, 0.5
    %v326 = vmul.f32 %v310, 0.5
    %v327 = vmul.f32 %v311, 0.5
    %v328 = vmul.f32 %v312, 0.5
    %v329 = vfloor.f32 %v313
    %v330 = vfloor.f32 %v314
    %v331 = vfloor.f32 %v315
    %v332 = vfloor.f32 %v316
    %v333 = vfloor.f32 %v317
    %v334 = vfloor.f32 %v318
    %v335 = vfloor.f32 %v319
    %v336 = vfloor.f32 %v320
    %v337 = vfloor.f32 %v321
    %v338 = vfloor.f32 %v322
    %v339 = vfloor.f32 %v323
    %v340 = vfloor.f32 %v324
    %v341 = vfloor.f32 %v325
    %v342 = vfloor.f32 %v326
    %v343 = vfloor.f32 %v327
    %v344 = vfloor.f32 %v328
    %v345 = vsub.f32 %v313, %v329
    %v346 = vsub.f32 %v314, %v330
    %v347 = vsub.f32 %v315, %v331
    %v348 = vsub.f32 %v316, %v332
    %v349 = vsub.f32 %v317, %v333
    %v350 = vsub.f32 %v318, %v334
    %v351 = vsub.f32 %v319, %v335
    %v352 = vsub.f32 %v320, %v336
    %v353 = vsub.f32 %v321, %v337
    %v354 = vsub.f32 %v322, %v338
    %v355 = vsub.f32 %v323, %v339
    %v356 = vsub.f32 %v324, %v340
    %v357 = vsub.f32 %v325, %v341
    %v358 = vsub.f32 %v326, %v342
    %v359 = vsub.f32 %v327, %v343
    %v360 = vsub.f32 %v328, %v344
    %v361 = vlaneseq
    %v362 = vand.u32 %v361, 127
    %v363 = vcvt.s32.f32 %v362
    %v364 = vrcp.pop 4.0
    %v365 = vmul.f32 4.0, %v364
    %v366 = vsub.f32 1.0, %v365
    %v367 = vmul.f32 %v364, %v366
    %v368 = vadd.f32 %v364, %v367
    %vm369 = vweird.f32 %v364
    %v370 = vsel %vm369, %v364, %v368
    %v371 = vmul.f32 %v363, %v370
    %v372 = vfloor.f32 %v371
    %v373 = vmul.f32 %v372, 4.0
    %v374 = vsub.f32 %v363, %v373
    %376 = vset.pattern.permute.xlu0 1
    %377 = vperm.xlu0 %376, %v329
    %v378 = vpop.permute.xlu0 %377
    %381 = vset.pattern.permute.xlu0 1
    %382 = vperm.xlu0 %381, %v330
    %v383 = vpop.permute.xlu0 %382
    %386 = vset.pattern.permute.xlu0 1
    %387 = vperm.xlu0 %386, %v331
    %v388 = vpop.permute.xlu0 %387
    %391 = vset.pattern.permute.xlu0 1
    %392 = vperm.xlu0 %391, %v332
    %v393 = vpop.permute.xlu0 %392
    %396 = vset.pattern.permute.xlu0 1
    %397 = vperm.xlu0 %396, %v333
    %v398 = vpop.permute.xlu0 %397
    %401 = vset.pattern.permute.xlu0 1
    %402 = vperm.xlu0 %401, %v334
    %v403 = vpop.permute.xlu0 %402
    %406 = vset.pattern.permute.xlu0 1
    %407 = vperm.xlu0 %406, %v335
    %v408 = vpop.permute.xlu0 %407
    %411 = vset.pattern.permute.xlu0 1
    %412 = vperm.xlu0 %411, %v336
    %v413 = vpop.permute.xlu0 %412
    %416 = vset.pattern.permute.xlu0 1
    %417 = vperm.xlu0 %416, %v337
    %v418 = vpop.permute.xlu0 %417
    %421 = vset.pattern.permute.xlu0 1
    %422 = vperm.xlu0 %421, %v338
    %v423 = vpop.permute.xlu0 %422
    %426 = vset.pattern.permute.xlu0 1
    %427 = vperm.xlu0 %426, %v339
    %v428 = vpop.permute.xlu0 %427
    %431 = vset.pattern.permute.xlu0 1
    %432 = vperm.xlu0 %431, %v340
    %v433 = vpop.permute.xlu0 %432
    %436 = vset.pattern.permute.xlu0 1
    %437 = vperm.xlu0 %436, %v341
    %v438 = vpop.permute.xlu0 %437
    %441 = vset.pattern.permute.xlu0 1
    %442 = vperm.xlu0 %441, %v342
    %v443 = vpop.permute.xlu0 %442
    %446 = vset.pattern.permute.xlu0 1
    %447 = vperm.xlu0 %446, %v343
    %v448 = vpop.permute.xlu0 %447
    %451 = vset.pattern.permute.xlu0 1
    %452 = vperm.xlu0 %451, %v344
    %v453 = vpop.permute.xlu0 %452
    %vm455 = vcmp.eq.f32.partialorder %v372, %v378
    %vm456 = vcmp.eq.f32.partialorder %v372, %v383
    %vm457 = vcmp.eq.f32.partialorder %v372, %v388
    %vm458 = vcmp.eq.f32.partialorder %v372, %v393
    %vm459 = vcmp.eq.f32.partialorder %v372, %v398
    %vm460 = vcmp.eq.f32.partialorder %v372, %v403
    %vm461 = vcmp.eq.f32.partialorder %v372, %v408
    %vm462 = vcmp.eq.f32.partialorder %v372, %v413
    %vm463 = vcmp.eq.f32.partialorder %v372, %v418
    %vm464 = vcmp.eq.f32.partialorder %v372, %v423
    %vm465 = vcmp.eq.f32.partialorder %v372, %v428
    %vm466 = vcmp.eq.f32.partialorder %v372, %v433
    %vm467 = vcmp.eq.f32.partialorder %v372, %v438
    %vm468 = vcmp.eq.f32.partialorder %v372, %v443
    %vm469 = vcmp.eq.f32.partialorder %v372, %v448
    %vm470 = vcmp.eq.f32.partialorder %v372, %v453
    %v471 = vsel %vm455, 1, 0
    %v472 = vsel %vm456, 1, 0
    %v473 = vsel %vm457, 1, 0
    %v474 = vsel %vm458, 1, 0
    %v475 = vsel %vm459, 1, 0
    %v476 = vsel %vm460, 1, 0
    %v477 = vsel %vm461, 1, 0
    %v478 = vsel %vm462, 1, 0
    %v479 = vsel %vm463, 1, 0
    %v480 = vsel %vm464, 1, 0
    %v481 = vsel %vm465, 1, 0
    %v482 = vsel %vm466, 1, 0
    %v483 = vsel %vm467, 1, 0
    %v484 = vsel %vm468, 1, 0
    %v485 = vsel %vm469, 1, 0
    %v486 = vsel %vm470, 1, 0
    %v487 = vcvt.s32.f32 %v471
    %v488 = vcvt.s32.f32 %v472
    %v489 = vcvt.s32.f32 %v473
    %v490 = vcvt.s32.f32 %v474
    %v491 = vcvt.s32.f32 %v475
    %v492 = vcvt.s32.f32 %v476
    %v493 = vcvt.s32.f32 %v477
    %v494 = vcvt.s32.f32 %v478
    %v495 = vcvt.s32.f32 %v479
    %v496 = vcvt.s32.f32 %v480
    %v497 = vcvt.s32.f32 %v481
    %v498 = vcvt.s32.f32 %v482
    %v499 = vcvt.s32.f32 %v483
    %v500 = vcvt.s32.f32 %v484
    %v501 = vcvt.s32.f32 %v485
    %v502 = vcvt.s32.f32 %v486
    %v503 = vsub.f32 1.0, %v345
    %v504 = vsub.f32 1.0, %v346
    %v505 = vsub.f32 1.0, %v347
    %v506 = vsub.f32 1.0, %v348
    %v507 = vsub.f32 1.0, %v349
    %v508 = vsub.f32 1.0, %v350
    %v509 = vsub.f32 1.0, %v351
    %v510 = vsub.f32 1.0, %v352
    %v511 = vsub.f32 1.0, %v353
    %v512 = vsub.f32 1.0, %v354
    %v513 = vsub.f32 1.0, %v355
    %v514 = vsub.f32 1.0, %v356
    %v515 = vsub.f32 1.0, %v357
    %v516 = vsub.f32 1.0, %v358
    %v517 = vsub.f32 1.0, %v359
    %v518 = vsub.f32 1.0, %v360
    %520 = vset.pattern.permute.xlu0 1
    %521 = vperm.xlu0 %520, %v503
    %v522 = vpop.permute.xlu0 %521
    %525 = vset.pattern.permute.xlu0 1
    %526 = vperm.xlu0 %525, %v504
    %v527 = vpop.permute.xlu0 %526
    %530 = vset.pattern.permute.xlu0 1
    %531 = vperm.xlu0 %530, %v505
    %v532 = vpop.permute.xlu0 %531
    %535 = vset.pattern.permute.xlu0 1
    %536 = vperm.xlu0 %535, %v506
    %v537 = vpop.permute.xlu0 %536
    %540 = vset.pattern.permute.xlu0 1
    %541 = vperm.xlu0 %540, %v507
    %v542 = vpop.permute.xlu0 %541
    %545 = vset.pattern.permute.xlu0 1
    %546 = vperm.xlu0 %545, %v508
    %v547 = vpop.permute.xlu0 %546
    %550 = vset.pattern.permute.xlu0 1
    %551 = vperm.xlu0 %550, %v509
    %v552 = vpop.permute.xlu0 %551
    %555 = vset.pattern.permute.xlu0 1
    %556 = vperm.xlu0 %555, %v510
    %v557 = vpop.permute.xlu0 %556
    %560 = vset.pattern.permute.xlu0 1
    %561 = vperm.xlu0 %560, %v511
    %v562 = vpop.permute.xlu0 %561
    %565 = vset.pattern.permute.xlu0 1
    %566 = vperm.xlu0 %565, %v512
    %v567 = vpop.permute.xlu0 %566
    %570 = vset.pattern.permute.xlu0 1
    %571 = vperm.xlu0 %570, %v513
    %v572 = vpop.permute.xlu0 %571
    %575 = vset.pattern.permute.xlu0 1
    %576 = vperm.xlu0 %575, %v514
    %v577 = vpop.permute.xlu0 %576
    %580 = vset.pattern.permute.xlu0 1
    %581 = vperm.xlu0 %580, %v515
    %v582 = vpop.permute.xlu0 %581
    %585 = vset.pattern.permute.xlu0 1
    %586 = vperm.xlu0 %585, %v516
    %v587 = vpop.permute.xlu0 %586
    %590 = vset.pattern.permute.xlu0 1
    %591 = vperm.xlu0 %590, %v517
    %v592 = vpop.permute.xlu0 %591
    %595 = vset.pattern.permute.xlu0 1
    %596 = vperm.xlu0 %595, %v518
    %v597 = vpop.permute.xlu0 %596
    %v599 = vmul.f32 %v487, %v522
    %v600 = vmul.f32 %v488, %v527
    %v601 = vmul.f32 %v489, %v532
    %v602 = vmul.f32 %v490, %v537
    %v603 = vmul.f32 %v491, %v542
    %v604 = vmul.f32 %v492, %v547
    %v605 = vmul.f32 %v493, %v552
    %v606 = vmul.f32 %v494, %v557
    %v607 = vmul.f32 %v495, %v562
    %v608 = vmul.f32 %v496, %v567
    %v609 = vmul.f32 %v497, %v572
    %v610 = vmul.f32 %v498, %v577
    %v611 = vmul.f32 %v499, %v582
    %v612 = vmul.f32 %v500, %v587
    %v613 = vmul.f32 %v501, %v592
    %v614 = vmul.f32 %v502, %v597
    %v615 = vadd.f32 %v329, 1.0
    %v616 = vadd.f32 %v330, 1.0
    %v617 = vadd.f32 %v331, 1.0
    %v618 = vadd.f32 %v332, 1.0
    %v619 = vadd.f32 %v333, 1.0
    %v620 = vadd.f32 %v334, 1.0
    %v621 = vadd.f32 %v335, 1.0
    %v622 = vadd.f32 %v336, 1.0
    %v623 = vadd.f32 %v337, 1.0
    %v624 = vadd.f32 %v338, 1.0
    %v625 = vadd.f32 %v339, 1.0
    %v626 = vadd.f32 %v340, 1.0
    %v627 = vadd.f32 %v341, 1.0
    %v628 = vadd.f32 %v342, 1.0
    %v629 = vadd.f32 %v343, 1.0
    %v630 = vadd.f32 %v344, 1.0
    %632 = vset.pattern.permute.xlu0 1
    %633 = vperm.xlu0 %632, %v615
    %v634 = vpop.permute.xlu0 %633
    %637 = vset.pattern.permute.xlu0 1
    %638 = vperm.xlu0 %637, %v616
    %v639 = vpop.permute.xlu0 %638
    %642 = vset.pattern.permute.xlu0 1
    %643 = vperm.xlu0 %642, %v617
    %v644 = vpop.permute.xlu0 %643
    %647 = vset.pattern.permute.xlu0 1
    %648 = vperm.xlu0 %647, %v618
    %v649 = vpop.permute.xlu0 %648
    %652 = vset.pattern.permute.xlu0 1
    %653 = vperm.xlu0 %652, %v619
    %v654 = vpop.permute.xlu0 %653
    %657 = vset.pattern.permute.xlu0 1
    %658 = vperm.xlu0 %657, %v620
    %v659 = vpop.permute.xlu0 %658
    %662 = vset.pattern.permute.xlu0 1
    %663 = vperm.xlu0 %662, %v621
    %v664 = vpop.permute.xlu0 %663
    %667 = vset.pattern.permute.xlu0 1
    %668 = vperm.xlu0 %667, %v622
    %v669 = vpop.permute.xlu0 %668
    %672 = vset.pattern.permute.xlu0 1
    %673 = vperm.xlu0 %672, %v623
    %v674 = vpop.permute.xlu0 %673
    %677 = vset.pattern.permute.xlu0 1
    %678 = vperm.xlu0 %677, %v624
    %v679 = vpop.permute.xlu0 %678
    %682 = vset.pattern.permute.xlu0 1
    %683 = vperm.xlu0 %682, %v625
    %v684 = vpop.permute.xlu0 %683
    %687 = vset.pattern.permute.xlu0 1
    %688 = vperm.xlu0 %687, %v626
    %v689 = vpop.permute.xlu0 %688
    %692 = vset.pattern.permute.xlu0 1
    %693 = vperm.xlu0 %692, %v627
    %v694 = vpop.permute.xlu0 %693
    %697 = vset.pattern.permute.xlu0 1
    %698 = vperm.xlu0 %697, %v628
    %v699 = vpop.permute.xlu0 %698
    %702 = vset.pattern.permute.xlu0 1
    %703 = vperm.xlu0 %702, %v629
    %v704 = vpop.permute.xlu0 %703
    %707 = vset.pattern.permute.xlu0 1
    %708 = vperm.xlu0 %707, %v630
    %v709 = vpop.permute.xlu0 %708
    %vm711 = vcmp.eq.f32.partialorder %v372, %v634
    %vm712 = vcmp.eq.f32.partialorder %v372, %v639
    %vm713 = vcmp.eq.f32.partialorder %v372, %v644
    %vm714 = vcmp.eq.f32.partialorder %v372, %v649
    %vm715 = vcmp.eq.f32.partialorder %v372, %v654
    %vm716 = vcmp.eq.f32.partialorder %v372, %v659
    %vm717 = vcmp.eq.f32.partialorder %v372, %v664
    %vm718 = vcmp.eq.f32.partialorder %v372, %v669
    %vm719 = vcmp.eq.f32.partialorder %v372, %v674
    %vm720 = vcmp.eq.f32.partialorder %v372, %v679
    %vm721 = vcmp.eq.f32.partialorder %v372, %v684
    %vm722 = vcmp.eq.f32.partialorder %v372, %v689
    %vm723 = vcmp.eq.f32.partialorder %v372, %v694
    %vm724 = vcmp.eq.f32.partialorder %v372, %v699
    %vm725 = vcmp.eq.f32.partialorder %v372, %v704
    %vm726 = vcmp.eq.f32.partialorder %v372, %v709
    %v727 = vsel %vm711, 1, 0
    %v728 = vsel %vm712, 1, 0
    %v729 = vsel %vm713, 1, 0
    %v730 = vsel %vm714, 1, 0
    %v731 = vsel %vm715, 1, 0
    %v732 = vsel %vm716, 1, 0
    %v733 = vsel %vm717, 1, 0
    %v734 = vsel %vm718, 1, 0
    %v735 = vsel %vm719, 1, 0
    %v736 = vsel %vm720, 1, 0
    %v737 = vsel %vm721, 1, 0
    %v738 = vsel %vm722, 1, 0
    %v739 = vsel %vm723, 1, 0
    %v740 = vsel %vm724, 1, 0
    %v741 = vsel %vm725, 1, 0
    %v742 = vsel %vm726, 1, 0
    %v743 = vcvt.s32.f32 %v727
    %v744 = vcvt.s32.f32 %v728
    %v745 = vcvt.s32.f32 %v729
    %v746 = vcvt.s32.f32 %v730
    %v747 = vcvt.s32.f32 %v731
    %v748 = vcvt.s32.f32 %v732
    %v749 = vcvt.s32.f32 %v733
    %v750 = vcvt.s32.f32 %v734
    %v751 = vcvt.s32.f32 %v735
    %v752 = vcvt.s32.f32 %v736
    %v753 = vcvt.s32.f32 %v737
    %v754 = vcvt.s32.f32 %v738
    %v755 = vcvt.s32.f32 %v739
    %v756 = vcvt.s32.f32 %v740
    %v757 = vcvt.s32.f32 %v741
    %v758 = vcvt.s32.f32 %v742
    %760 = vset.pattern.permute.xlu0 1
    %761 = vperm.xlu0 %760, %v345
    %v762 = vpop.permute.xlu0 %761
    %765 = vset.pattern.permute.xlu0 1
    %766 = vperm.xlu0 %765, %v346
    %v767 = vpop.permute.xlu0 %766
    %770 = vset.pattern.permute.xlu0 1
    %771 = vperm.xlu0 %770, %v347
    %v772 = vpop.permute.xlu0 %771
    %775 = vset.pattern.permute.xlu0 1
    %776 = vperm.xlu0 %775, %v348
    %v777 = vpop.permute.xlu0 %776
    %780 = vset.pattern.permute.xlu0 1
    %781 = vperm.xlu0 %780, %v349
    %v782 = vpop.permute.xlu0 %781
    %785 = vset.pattern.permute.xlu0 1
    %786 = vperm.xlu0 %785, %v350
    %v787 = vpop.permute.xlu0 %786
    %790 = vset.pattern.permute.xlu0 1
    %791 = vperm.xlu0 %790, %v351
    %v792 = vpop.permute.xlu0 %791
    %795 = vset.pattern.permute.xlu0 1
    %796 = vperm.xlu0 %795, %v352
    %v797 = vpop.permute.xlu0 %796
    %800 = vset.pattern.permute.xlu0 1
    %801 = vperm.xlu0 %800, %v353
    %v802 = vpop.permute.xlu0 %801
    %805 = vset.pattern.permute.xlu0 1
    %806 = vperm.xlu0 %805, %v354
    %v807 = vpop.permute.xlu0 %806
    %810 = vset.pattern.permute.xlu0 1
    %811 = vperm.xlu0 %810, %v355
    %v812 = vpop.permute.xlu0 %811
    %815 = vset.pattern.permute.xlu0 1
    %816 = vperm.xlu0 %815, %v356
    %v817 = vpop.permute.xlu0 %816
    %820 = vset.pattern.permute.xlu0 1
    %821 = vperm.xlu0 %820, %v357
    %v822 = vpop.permute.xlu0 %821
    %825 = vset.pattern.permute.xlu0 1
    %826 = vperm.xlu0 %825, %v358
    %v827 = vpop.permute.xlu0 %826
    %830 = vset.pattern.permute.xlu0 1
    %831 = vperm.xlu0 %830, %v359
    %v832 = vpop.permute.xlu0 %831
    %835 = vset.pattern.permute.xlu0 1
    %836 = vperm.xlu0 %835, %v360
    %v837 = vpop.permute.xlu0 %836
    %v839 = vmul.f32 %v743, %v762
    %v840 = vmul.f32 %v744, %v767
    %v841 = vmul.f32 %v745, %v772
    %v842 = vmul.f32 %v746, %v777
    %v843 = vmul.f32 %v747, %v782
    %v844 = vmul.f32 %v748, %v787
    %v845 = vmul.f32 %v749, %v792
    %v846 = vmul.f32 %v750, %v797
    %v847 = vmul.f32 %v751, %v802
    %v848 = vmul.f32 %v752, %v807
    %v849 = vmul.f32 %v753, %v812
    %v850 = vmul.f32 %v754, %v817
    %v851 = vmul.f32 %v755, %v822
    %v852 = vmul.f32 %v756, %v827
    %v853 = vmul.f32 %v757, %v832
    %v854 = vmul.f32 %v758, %v837
    %v855 = vadd.f32 %v599, %v839
    %v856 = vadd.f32 %v600, %v840
    %v857 = vadd.f32 %v601, %v841
    %v858 = vadd.f32 %v602, %v842
    %v859 = vadd.f32 %v603, %v843
    %v860 = vadd.f32 %v604, %v844
    %v861 = vadd.f32 %v605, %v845
    %v862 = vadd.f32 %v606, %v846
    %v863 = vadd.f32 %v607, %v847
    %v864 = vadd.f32 %v608, %v848
    %v865 = vadd.f32 %v609, %v849
    %v866 = vadd.f32 %v610, %v850
    %v867 = vadd.f32 %v611, %v851
    %v868 = vadd.f32 %v612, %v852
    %v869 = vadd.f32 %v613, %v853
    %v870 = vadd.f32 %v614, %v854
    %871 = vset.pattern.permute.xlu0 0
    %872 = vperm.xlu0 %871, %v329
    %v873 = vpop.permute.xlu0 %872
    %875 = vset.pattern.permute.xlu0 0
    %876 = vperm.xlu0 %875, %v330
    %v877 = vpop.permute.xlu0 %876
    %879 = vset.pattern.permute.xlu0 0
    %880 = vperm.xlu0 %879, %v331
    %v881 = vpop.permute.xlu0 %880
    %883 = vset.pattern.permute.xlu0 0
    %884 = vperm.xlu0 %883, %v332
    %v885 = vpop.permute.xlu0 %884
    %887 = vset.pattern.permute.xlu0 0
    %888 = vperm.xlu0 %887, %v333
    %v889 = vpop.permute.xlu0 %888
    %891 = vset.pattern.permute.xlu0 0
    %892 = vperm.xlu0 %891, %v334
    %v893 = vpop.permute.xlu0 %892
    %895 = vset.pattern.permute.xlu0 0
    %896 = vperm.xlu0 %895, %v335
    %v897 = vpop.permute.xlu0 %896
    %899 = vset.pattern.permute.xlu0 0
    %900 = vperm.xlu0 %899, %v336
    %v901 = vpop.permute.xlu0 %900
    %903 = vset.pattern.permute.xlu0 0
    %904 = vperm.xlu0 %903, %v337
    %v905 = vpop.permute.xlu0 %904
    %907 = vset.pattern.permute.xlu0 0
    %908 = vperm.xlu0 %907, %v338
    %v909 = vpop.permute.xlu0 %908
    %911 = vset.pattern.permute.xlu0 0
    %912 = vperm.xlu0 %911, %v339
    %v913 = vpop.permute.xlu0 %912
    %915 = vset.pattern.permute.xlu0 0
    %916 = vperm.xlu0 %915, %v340
    %v917 = vpop.permute.xlu0 %916
    %919 = vset.pattern.permute.xlu0 0
    %920 = vperm.xlu0 %919, %v341
    %v921 = vpop.permute.xlu0 %920
    %923 = vset.pattern.permute.xlu0 0
    %924 = vperm.xlu0 %923, %v342
    %v925 = vpop.permute.xlu0 %924
    %927 = vset.pattern.permute.xlu0 0
    %928 = vperm.xlu0 %927, %v343
    %v929 = vpop.permute.xlu0 %928
    %931 = vset.pattern.permute.xlu0 0
    %932 = vperm.xlu0 %931, %v344
    %v933 = vpop.permute.xlu0 %932
    %vm935 = vcmp.eq.f32.partialorder %v374, %v873
    %vm936 = vcmp.eq.f32.partialorder %v374, %v877
    %vm937 = vcmp.eq.f32.partialorder %v374, %v881
    %vm938 = vcmp.eq.f32.partialorder %v374, %v885
    %vm939 = vcmp.eq.f32.partialorder %v374, %v889
    %vm940 = vcmp.eq.f32.partialorder %v374, %v893
    %vm941 = vcmp.eq.f32.partialorder %v374, %v897
    %vm942 = vcmp.eq.f32.partialorder %v374, %v901
    %vm943 = vcmp.eq.f32.partialorder %v374, %v905
    %vm944 = vcmp.eq.f32.partialorder %v374, %v909
    %vm945 = vcmp.eq.f32.partialorder %v374, %v913
    %vm946 = vcmp.eq.f32.partialorder %v374, %v917
    %vm947 = vcmp.eq.f32.partialorder %v374, %v921
    %vm948 = vcmp.eq.f32.partialorder %v374, %v925
    %vm949 = vcmp.eq.f32.partialorder %v374, %v929
    %vm950 = vcmp.eq.f32.partialorder %v374, %v933
    %v951 = vsel %vm935, 1, 0
    %v952 = vsel %vm936, 1, 0
    %v953 = vsel %vm937, 1, 0
    %v954 = vsel %vm938, 1, 0
    %v955 = vsel %vm939, 1, 0
    %v956 = vsel %vm940, 1, 0
    %v957 = vsel %vm941, 1, 0
    %v958 = vsel %vm942, 1, 0
    %v959 = vsel %vm943, 1, 0
    %v960 = vsel %vm944, 1, 0
    %v961 = vsel %vm945, 1, 0
    %v962 = vsel %vm946, 1, 0
    %v963 = vsel %vm947, 1, 0
    %v964 = vsel %vm948, 1, 0
    %v965 = vsel %vm949, 1, 0
    %v966 = vsel %vm950, 1, 0
    %v967 = vcvt.s32.f32 %v951
    %v968 = vcvt.s32.f32 %v952
    %v969 = vcvt.s32.f32 %v953
    %v970 = vcvt.s32.f32 %v954
    %v971 = vcvt.s32.f32 %v955
    %v972 = vcvt.s32.f32 %v956
    %v973 = vcvt.s32.f32 %v957
    %v974 = vcvt.s32.f32 %v958
    %v975 = vcvt.s32.f32 %v959
    %v976 = vcvt.s32.f32 %v960
    %v977 = vcvt.s32.f32 %v961
    %v978 = vcvt.s32.f32 %v962
    %v979 = vcvt.s32.f32 %v963
    %v980 = vcvt.s32.f32 %v964
    %v981 = vcvt.s32.f32 %v965
    %v982 = vcvt.s32.f32 %v966
    %983 = vset.pattern.permute.xlu0 0
    %984 = vperm.xlu0 %983, %v503
    %v985 = vpop.permute.xlu0 %984
    %987 = vset.pattern.permute.xlu0 0
    %988 = vperm.xlu0 %987, %v504
    %v989 = vpop.permute.xlu0 %988
    %991 = vset.pattern.permute.xlu0 0
    %992 = vperm.xlu0 %991, %v505
    %v993 = vpop.permute.xlu0 %992
    %995 = vset.pattern.permute.xlu0 0
    %996 = vperm.xlu0 %995, %v506
    %v997 = vpop.permute.xlu0 %996
    %999 = vset.pattern.permute.xlu0 0
    %1000 = vperm.xlu0 %999, %v507
    %v1001 = vpop.permute.xlu0 %1000
    %1003 = vset.pattern.permute.xlu0 0
    %1004 = vperm.xlu0 %1003, %v508
    %v1005 = vpop.permute.xlu0 %1004
    %1007 = vset.pattern.permute.xlu0 0
    %1008 = vperm.xlu0 %1007, %v509
    %v1009 = vpop.permute.xlu0 %1008
    %1011 = vset.pattern.permute.xlu0 0
    %1012 = vperm.xlu0 %1011, %v510
    %v1013 = vpop.permute.xlu0 %1012
    %1015 = vset.pattern.permute.xlu0 0
    %1016 = vperm.xlu0 %1015, %v511
    %v1017 = vpop.permute.xlu0 %1016
    %1019 = vset.pattern.permute.xlu0 0
    %1020 = vperm.xlu0 %1019, %v512
    %v1021 = vpop.permute.xlu0 %1020
    %1023 = vset.pattern.permute.xlu0 0
    %1024 = vperm.xlu0 %1023, %v513
    %v1025 = vpop.permute.xlu0 %1024
    %1027 = vset.pattern.permute.xlu0 0
    %1028 = vperm.xlu0 %1027, %v514
    %v1029 = vpop.permute.xlu0 %1028
    %1031 = vset.pattern.permute.xlu0 0
    %1032 = vperm.xlu0 %1031, %v515
    %v1033 = vpop.permute.xlu0 %1032
    %1035 = vset.pattern.permute.xlu0 0
    %1036 = vperm.xlu0 %1035, %v516
    %v1037 = vpop.permute.xlu0 %1036
    %1039 = vset.pattern.permute.xlu0 0
    %1040 = vperm.xlu0 %1039, %v517
    %v1041 = vpop.permute.xlu0 %1040
    %1043 = vset.pattern.permute.xlu0 0
    %1044 = vperm.xlu0 %1043, %v518
    %v1045 = vpop.permute.xlu0 %1044
    %v1047 = vmul.f32 %v967, %v985
    %v1048 = vmul.f32 %v968, %v989
    %v1049 = vmul.f32 %v969, %v993
    %v1050 = vmul.f32 %v970, %v997
    %v1051 = vmul.f32 %v971, %v1001
    %v1052 = vmul.f32 %v972, %v1005
    %v1053 = vmul.f32 %v973, %v1009
    %v1054 = vmul.f32 %v974, %v1013
    %v1055 = vmul.f32 %v975, %v1017
    %v1056 = vmul.f32 %v976, %v1021
    %v1057 = vmul.f32 %v977, %v1025
    %v1058 = vmul.f32 %v978, %v1029
    %v1059 = vmul.f32 %v979, %v1033
    %v1060 = vmul.f32 %v980, %v1037
    %v1061 = vmul.f32 %v981, %v1041
    %v1062 = vmul.f32 %v982, %v1045
    %1063 = vset.pattern.permute.xlu0 0
    %1064 = vperm.xlu0 %1063, %v615
    %v1065 = vpop.permute.xlu0 %1064
    %1067 = vset.pattern.permute.xlu0 0
    %1068 = vperm.xlu0 %1067, %v616
    %v1069 = vpop.permute.xlu0 %1068
    %1071 = vset.pattern.permute.xlu0 0
    %1072 = vperm.xlu0 %1071, %v617
    %v1073 = vpop.permute.xlu0 %1072
    %1075 = vset.pattern.permute.xlu0 0
    %1076 = vperm.xlu0 %1075, %v618
    %v1077 = vpop.permute.xlu0 %1076
    %1079 = vset.pattern.permute.xlu0 0
    %1080 = vperm.xlu0 %1079, %v619
    %v1081 = vpop.permute.xlu0 %1080
    %1083 = vset.pattern.permute.xlu0 0
    %1084 = vperm.xlu0 %1083, %v620
    %v1085 = vpop.permute.xlu0 %1084
    %1087 = vset.pattern.permute.xlu0 0
    %1088 = vperm.xlu0 %1087, %v621
    %v1089 = vpop.permute.xlu0 %1088
    %1091 = vset.pattern.permute.xlu0 0
    %1092 = vperm.xlu0 %1091, %v622
    %v1093 = vpop.permute.xlu0 %1092
    %1095 = vset.pattern.permute.xlu0 0
    %1096 = vperm.xlu0 %1095, %v623
    %v1097 = vpop.permute.xlu0 %1096
    %1099 = vset.pattern.permute.xlu0 0
    %1100 = vperm.xlu0 %1099, %v624
    %v1101 = vpop.permute.xlu0 %1100
    %1103 = vset.pattern.permute.xlu0 0
    %1104 = vperm.xlu0 %1103, %v625
    %v1105 = vpop.permute.xlu0 %1104
    %1107 = vset.pattern.permute.xlu0 0
    %1108 = vperm.xlu0 %1107, %v626
    %v1109 = vpop.permute.xlu0 %1108
    %1111 = vset.pattern.permute.xlu0 0
    %1112 = vperm.xlu0 %1111, %v627
    %v1113 = vpop.permute.xlu0 %1112
    %1115 = vset.pattern.permute.xlu0 0
    %1116 = vperm.xlu0 %1115, %v628
    %v1117 = vpop.permute.xlu0 %1116
    %1119 = vset.pattern.permute.xlu0 0
    %1120 = vperm.xlu0 %1119, %v629
    %v1121 = vpop.permute.xlu0 %1120
    %1123 = vset.pattern.permute.xlu0 0
    %1124 = vperm.xlu0 %1123, %v630
    %v1125 = vpop.permute.xlu0 %1124
    %vm1127 = vcmp.eq.f32.partialorder %v374, %v1065
    %vm1128 = vcmp.eq.f32.partialorder %v374, %v1069
    %vm1129 = vcmp.eq.f32.partialorder %v374, %v1073
    %vm1130 = vcmp.eq.f32.partialorder %v374, %v1077
    %vm1131 = vcmp.eq.f32.partialorder %v374, %v1081
    %vm1132 = vcmp.eq.f32.partialorder %v374, %v1085
    %vm1133 = vcmp.eq.f32.partialorder %v374, %v1089
    %vm1134 = vcmp.eq.f32.partialorder %v374, %v1093
    %vm1135 = vcmp.eq.f32.partialorder %v374, %v1097
    %vm1136 = vcmp.eq.f32.partialorder %v374, %v1101
    %vm1137 = vcmp.eq.f32.partialorder %v374, %v1105
    %vm1138 = vcmp.eq.f32.partialorder %v374, %v1109
    %vm1139 = vcmp.eq.f32.partialorder %v374, %v1113
    %vm1140 = vcmp.eq.f32.partialorder %v374, %v1117
    %vm1141 = vcmp.eq.f32.partialorder %v374, %v1121
    %vm1142 = vcmp.eq.f32.partialorder %v374, %v1125
    %v1143 = vsel %vm1127, 1, 0
    %v1144 = vsel %vm1128, 1, 0
    %v1145 = vsel %vm1129, 1, 0
    %v1146 = vsel %vm1130, 1, 0
    %v1147 = vsel %vm1131, 1, 0
    %v1148 = vsel %vm1132, 1, 0
    %v1149 = vsel %vm1133, 1, 0
    %v1150 = vsel %vm1134, 1, 0
    %v1151 = vsel %vm1135, 1, 0
    %v1152 = vsel %vm1136, 1, 0
    %v1153 = vsel %vm1137, 1, 0
    %v1154 = vsel %vm1138, 1, 0
    %v1155 = vsel %vm1139, 1, 0
    %v1156 = vsel %vm1140, 1, 0
    %v1157 = vsel %vm1141, 1, 0
    %v1158 = vsel %vm1142, 1, 0
    %v1159 = vcvt.s32.f32 %v1143
    %v1160 = vcvt.s32.f32 %v1144
    %v1161 = vcvt.s32.f32 %v1145
    %v1162 = vcvt.s32.f32 %v1146
    %v1163 = vcvt.s32.f32 %v1147
    %v1164 = vcvt.s32.f32 %v1148
    %v1165 = vcvt.s32.f32 %v1149
    %v1166 = vcvt.s32.f32 %v1150
    %v1167 = vcvt.s32.f32 %v1151
    %v1168 = vcvt.s32.f32 %v1152
    %v1169 = vcvt.s32.f32 %v1153
    %v1170 = vcvt.s32.f32 %v1154
    %v1171 = vcvt.s32.f32 %v1155
    %v1172 = vcvt.s32.f32 %v1156
    %v1173 = vcvt.s32.f32 %v1157
    %v1174 = vcvt.s32.f32 %v1158
    %1175 = vset.pattern.permute.xlu0 0
    %1176 = vperm.xlu0 %1175, %v345
    %v1177 = vpop.permute.xlu0 %1176
    %1179 = vset.pattern.permute.xlu0 0
    %1180 = vperm.xlu0 %1179, %v346
    %v1181 = vpop.permute.xlu0 %1180
    %1183 = vset.pattern.permute.xlu0 0
    %1184 = vperm.xlu0 %1183, %v347
    %v1185 = vpop.permute.xlu0 %1184
    %1187 = vset.pattern.permute.xlu0 0
    %1188 = vperm.xlu0 %1187, %v348
    %v1189 = vpop.permute.xlu0 %1188
    %1191 = vset.pattern.permute.xlu0 0
    %1192 = vperm.xlu0 %1191, %v349
    %v1193 = vpop.permute.xlu0 %1192
    %1195 = vset.pattern.permute.xlu0 0
    %1196 = vperm.xlu0 %1195, %v350
    %v1197 = vpop.permute.xlu0 %1196
    %1199 = vset.pattern.permute.xlu0 0
    %1200 = vperm.xlu0 %1199, %v351
    %v1201 = vpop.permute.xlu0 %1200
    %1203 = vset.pattern.permute.xlu0 0
    %1204 = vperm.xlu0 %1203, %v352
    %v1205 = vpop.permute.xlu0 %1204
    %1207 = vset.pattern.permute.xlu0 0
    %1208 = vperm.xlu0 %1207, %v353
    %v1209 = vpop.permute.xlu0 %1208
    %1211 = vset.pattern.permute.xlu0 0
    %1212 = vperm.xlu0 %1211, %v354
    %v1213 = vpop.permute.xlu0 %1212
    %1215 = vset.pattern.permute.xlu0 0
    %1216 = vperm.xlu0 %1215, %v355
    %v1217 = vpop.permute.xlu0 %1216
    %1219 = vset.pattern.permute.xlu0 0
    %1220 = vperm.xlu0 %1219, %v356
    %v1221 = vpop.permute.xlu0 %1220
    %1223 = vset.pattern.permute.xlu0 0
    %1224 = vperm.xlu0 %1223, %v357
    %v1225 = vpop.permute.xlu0 %1224
    %1227 = vset.pattern.permute.xlu0 0
    %1228 = vperm.xlu0 %1227, %v358
    %v1229 = vpop.permute.xlu0 %1228
    %1231 = vset.pattern.permute.xlu0 0
    %1232 = vperm.xlu0 %1231, %v359
    %v1233 = vpop.permute.xlu0 %1232
    %1235 = vset.pattern.permute.xlu0 0
    %1236 = vperm.xlu0 %1235, %v360
    %v1237 = vpop.permute.xlu0 %1236
    %v1239 = vmul.f32 %v1159, %v1177
    %v1240 = vmul.f32 %v1160, %v1181
    %v1241 = vmul.f32 %v1161, %v1185
    %v1242 = vmul.f32 %v1162, %v1189
    %v1243 = vmul.f32 %v1163, %v1193
    %v1244 = vmul.f32 %v1164, %v1197
    %v1245 = vmul.f32 %v1165, %v1201
    %v1246 = vmul.f32 %v1166, %v1205
    %v1247 = vmul.f32 %v1167, %v1209
    %v1248 = vmul.f32 %v1168, %v1213
    %v1249 = vmul.f32 %v1169, %v1217
    %v1250 = vmul.f32 %v1170, %v1221
    %v1251 = vmul.f32 %v1171, %v1225
    %v1252 = vmul.f32 %v1172, %v1229
    %v1253 = vmul.f32 %v1173, %v1233
    %v1254 = vmul.f32 %v1174, %v1237
    %v1255 = vadd.f32 %v1047, %v1239
    %v1256 = vadd.f32 %v1048, %v1240
    %v1257 = vadd.f32 %v1049, %v1241
    %v1258 = vadd.f32 %v1050, %v1242
    %v1259 = vadd.f32 %v1051, %v1243
    %v1260 = vadd.f32 %v1052, %v1244
    %v1261 = vadd.f32 %v1053, %v1245
    %v1262 = vadd.f32 %v1054, %v1246
    %v1263 = vadd.f32 %v1055, %v1247
    %v1264 = vadd.f32 %v1056, %v1248
    %v1265 = vadd.f32 %v1057, %v1249
    %v1266 = vadd.f32 %v1058, %v1250
    %v1267 = vadd.f32 %v1059, %v1251
    %v1268 = vadd.f32 %v1060, %v1252
    %v1269 = vadd.f32 %v1061, %v1253
    %v1270 = vadd.f32 %v1062, %v1254
    %v1271 = vmul.f32 %v855, %v1255
    %v1272 = vmul.f32 %v856, %v1256
    %v1273 = vmul.f32 %v857, %v1257
    %v1274 = vmul.f32 %v858, %v1258
    %v1275 = vmul.f32 %v859, %v1259
    %v1276 = vmul.f32 %v860, %v1260
    %v1277 = vmul.f32 %v861, %v1261
    %v1278 = vmul.f32 %v862, %v1262
    %v1279 = vmul.f32 %v863, %v1263
    %v1280 = vmul.f32 %v864, %v1264
    %v1281 = vmul.f32 %v865, %v1265
    %v1282 = vmul.f32 %v866, %v1266
    %v1283 = vmul.f32 %v867, %v1267
    %v1284 = vmul.f32 %v868, %v1268
    %v1285 = vmul.f32 %v869, %v1269
    %v1286 = vmul.f32 %v870, %v1270
    %v1287 = vpack.c.bf16 %v1272, %v1271
    %v1288 = vpack.c.bf16 %v1274, %v1273
    %v1289 = vpack.c.bf16 %v1276, %v1275
    %v1290 = vpack.c.bf16 %v1278, %v1277
    %v1291 = vpack.c.bf16 %v1280, %v1279
    %v1292 = vpack.c.bf16 %v1282, %v1281
    %v1293 = vpack.c.bf16 %v1284, %v1283
    %v1294 = vpack.c.bf16 %v1286, %v1285
    %v1295 = vld [vmem:[%s1] sm:$0xf]
    %v1296 = vld [vmem:[%s1 + $0x4] sm:$0xf]
    %v1297 = vld [vmem:[%s1 + $0x8] sm:$0xf]
    %v1298 = vld [vmem:[%s1 + $0xc] sm:$0xf]
    %v1299 = vld [vmem:[%s1 + $0x10] sm:$0xf]
    %v1300 = vld [vmem:[%s1 + $0x14] sm:$0xf]
    %v1301 = vld [vmem:[%s1 + $0x18] sm:$0xf]
    %v1302 = vld [vmem:[%s1 + $0x1c] sm:$0xf]
    %v1303 = vld [vmem:[%s1 + $0x20] sm:$0xf]
    %v1304 = vld [vmem:[%s1 + $0x24] sm:$0xf]
    %v1305 = vld [vmem:[%s1 + $0x28] sm:$0xf]
    %v1306 = vld [vmem:[%s1 + $0x2c] sm:$0xf]
    %v1307 = vld [vmem:[%s1 + $0x30] sm:$0xf]
    %v1308 = vld [vmem:[%s1 + $0x34] sm:$0xf]
    %v1309 = vld [vmem:[%s1 + $0x38] sm:$0xf]
    %v1310 = vld [vmem:[%s1 + $0x3c] sm:$0xf]
    %v1311 = vunpack.c.l.bf16 %v1295
    %v1312 = vunpack.c.l.bf16 %v1296
    %v1313 = vunpack.c.l.bf16 %v1297
    %v1314 = vunpack.c.l.bf16 %v1298
    %v1315 = vunpack.c.l.bf16 %v1299
    %v1316 = vunpack.c.l.bf16 %v1300
    %v1317 = vunpack.c.l.bf16 %v1301
    %v1318 = vunpack.c.l.bf16 %v1302
    %v1319 = vunpack.c.l.bf16 %v1303
    %v1320 = vunpack.c.l.bf16 %v1304
    %v1321 = vunpack.c.l.bf16 %v1305
    %v1322 = vunpack.c.l.bf16 %v1306
    %v1323 = vunpack.c.l.bf16 %v1307
    %v1324 = vunpack.c.l.bf16 %v1308
    %v1325 = vunpack.c.l.bf16 %v1309
    %v1326 = vunpack.c.l.bf16 %v1310
    %v1327 = vld [vmem:[%s6] sm:$0xf]
    %v1328 = vld [vmem:[%s6 + $0x4] sm:$0xf]
    %v1331 = vunpack.c.l.b16 %v1327
    %v1332 = vunpack.c.l.b16 %v1328
    %v1333 = vpack.c.b16 %v1332, %v1331
    %v1336 = vsel %vm66, %v1287, 0
    %v1339 = vsel %vm66, %v1288, 0
    %v1342 = vsel %vm66, %v1289, 0
    %v1345 = vsel %vm66, %v1290, 0
    %v1348 = vsel %vm66, %v1291, 0
    %v1351 = vsel %vm66, %v1292, 0
    %v1354 = vsel %vm66, %v1293, 0
    %v1357 = vsel %vm66, %v1294, 0
    %1359 = vmatpush.bf16.msra.mxu0 0
    %1360 = vmatpush.bf16.msra.mxu0 0
    %1361 = vmatpush.bf16.msra.mxu0 0
    %1362 = vmatpush.bf16.msra.mxu0 0
    %1363 = vmatpush.bf16.msra.mxu0 0
    %1364 = vmatpush.bf16.msra.mxu0 0
    %1365 = vmatpush.bf16.msra.mxu0 0
    %1366 = vmatpush.bf16.msra.mxu0 %v1333
    %1367 = vmatmul.bf16.gmra.mxu0 %v1336
    %v1368 = vpop.f32.mrf.mxu0
    %v1369 = vadd.f32 0.0, %v1368
    %v1370 = vpop.f32.mrf.mxu0
    %v1371 = vadd.f32 0.0, %v1370
    %1372 = vmatmul.bf16.gmra.mxu0 %v1339
    %v1373 = vpop.f32.mrf.mxu0
    %v1374 = vadd.f32 0.0, %v1373
    %v1375 = vpop.f32.mrf.mxu0
    %v1376 = vadd.f32 0.0, %v1375
    %1377 = vmatmul.bf16.gmra.mxu0 %v1342
    %v1378 = vpop.f32.mrf.mxu0
    %v1379 = vadd.f32 0.0, %v1378
    %v1380 = vpop.f32.mrf.mxu0
    %v1381 = vadd.f32 0.0, %v1380
    %1382 = vmatmul.bf16.gmra.mxu0 %v1345
    %v1383 = vpop.f32.mrf.mxu0
    %v1384 = vadd.f32 0.0, %v1383
    %v1385 = vpop.f32.mrf.mxu0
    %v1386 = vadd.f32 0.0, %v1385
    %1387 = vmatmul.bf16.gmra.mxu0 %v1348
    %v1388 = vpop.f32.mrf.mxu0
    %v1389 = vadd.f32 0.0, %v1388
    %v1390 = vpop.f32.mrf.mxu0
    %v1391 = vadd.f32 0.0, %v1390
    %1392 = vmatmul.bf16.gmra.mxu0 %v1351
    %v1393 = vpop.f32.mrf.mxu0
    %v1394 = vadd.f32 0.0, %v1393
    %v1395 = vpop.f32.mrf.mxu0
    %v1396 = vadd.f32 0.0, %v1395
    %1397 = vmatmul.bf16.gmra.mxu0 %v1354
    %v1398 = vpop.f32.mrf.mxu0
    %v1399 = vadd.f32 0.0, %v1398
    %v1400 = vpop.f32.mrf.mxu0
    %v1401 = vadd.f32 0.0, %v1400
    %1402 = vmatmul.bf16.gmra.mxu0 %v1357
    %v1403 = vpop.f32.mrf.mxu0
    %v1404 = vadd.f32 0.0, %v1403
    %v1405 = vpop.f32.mrf.mxu0
    %v1406 = vadd.f32 0.0, %v1405
    %1407 = vdwg.mxu0
    %v1408 = vadd.f32 %v1311, %v1369
    %v1409 = vadd.f32 %v1312, %v1371
    %v1410 = vadd.f32 %v1313, %v1374
    %v1411 = vadd.f32 %v1314, %v1376
    %v1412 = vadd.f32 %v1315, %v1379
    %v1413 = vadd.f32 %v1316, %v1381
    %v1414 = vadd.f32 %v1317, %v1384
    %v1415 = vadd.f32 %v1318, %v1386
    %v1416 = vadd.f32 %v1319, %v1389
    %v1417 = vadd.f32 %v1320, %v1391
    %v1418 = vadd.f32 %v1321, %v1394
    %v1419 = vadd.f32 %v1322, %v1396
    %v1420 = vadd.f32 %v1323, %v1399
    %v1421 = vadd.f32 %v1324, %v1401
    %v1422 = vadd.f32 %v1325, %v1404
    %v1423 = vadd.f32 %v1326, %v1406
    %v1424 = vsub.f32 %v1408, %v30
    %v1425 = vsub.f32 %v1409, %v31
    %v1426 = vsub.f32 %v1410, %v32
    %v1427 = vsub.f32 %v1411, %v33
    %v1428 = vsub.f32 %v1412, %v34
    %v1429 = vsub.f32 %v1413, %v35
    %v1430 = vsub.f32 %v1414, %v36
    %v1431 = vsub.f32 %v1415, %v37
    %v1432 = vsub.f32 %v1416, %v38
    %v1433 = vsub.f32 %v1417, %v39
    %v1434 = vsub.f32 %v1418, %v40
    %v1435 = vsub.f32 %v1419, %v41
    %v1436 = vsub.f32 %v1420, %v42
    %v1437 = vsub.f32 %v1421, %v43
    %v1438 = vsub.f32 %v1422, %v44
    %v1439 = vsub.f32 %v1423, %v45
    %v1440 = vmul.f32 %v1424, %v1424
    %v1441 = vmul.f32 %v1425, %v1425
    %v1442 = vmul.f32 %v1426, %v1426
    %v1443 = vmul.f32 %v1427, %v1427
    %v1444 = vmul.f32 %v1428, %v1428
    %v1445 = vmul.f32 %v1429, %v1429
    %v1446 = vmul.f32 %v1430, %v1430
    %v1447 = vmul.f32 %v1431, %v1431
    %v1448 = vmul.f32 %v1432, %v1432
    %v1449 = vmul.f32 %v1433, %v1433
    %v1450 = vmul.f32 %v1434, %v1434
    %v1451 = vmul.f32 %v1435, %v1435
    %v1452 = vmul.f32 %v1436, %v1436
    %v1453 = vmul.f32 %v1437, %v1437
    %v1454 = vmul.f32 %v1438, %v1438
    %v1455 = vmul.f32 %v1439, %v1439
    %v1456 = vsel %vm66, %v1440, 0.0
    %1457 = vadd.xlane.f32.xlu0 %v1456
    %v1458 = vpop.xlane.xlu0 %1457
    %v1459 = vsel %vm66, %v1441, 0.0
    %1460 = vadd.xlane.f32.xlu0 %v1459
    %v1461 = vpop.xlane.xlu0 %1460
    %v1462 = vsel %vm66, %v1442, 0.0
    %1463 = vadd.xlane.f32.xlu0 %v1462
    %v1464 = vpop.xlane.xlu0 %1463
    %v1465 = vsel %vm66, %v1443, 0.0
    %1466 = vadd.xlane.f32.xlu0 %v1465
    %v1467 = vpop.xlane.xlu0 %1466
    %v1468 = vsel %vm66, %v1444, 0.0
    %1469 = vadd.xlane.f32.xlu0 %v1468
    %v1470 = vpop.xlane.xlu0 %1469
    %v1471 = vsel %vm66, %v1445, 0.0
    %1472 = vadd.xlane.f32.xlu0 %v1471
    %v1473 = vpop.xlane.xlu0 %1472
    %v1474 = vsel %vm66, %v1446, 0.0
    %1475 = vadd.xlane.f32.xlu0 %v1474
    %v1476 = vpop.xlane.xlu0 %1475
    %v1477 = vsel %vm66, %v1447, 0.0
    %1478 = vadd.xlane.f32.xlu0 %v1477
    %v1479 = vpop.xlane.xlu0 %1478
    %v1480 = vsel %vm66, %v1448, 0.0
    %1481 = vadd.xlane.f32.xlu0 %v1480
    %v1482 = vpop.xlane.xlu0 %1481
    %v1483 = vsel %vm66, %v1449, 0.0
    %1484 = vadd.xlane.f32.xlu0 %v1483
    %v1485 = vpop.xlane.xlu0 %1484
    %v1486 = vsel %vm66, %v1450, 0.0
    %1487 = vadd.xlane.f32.xlu0 %v1486
    %v1488 = vpop.xlane.xlu0 %1487
    %v1489 = vsel %vm66, %v1451, 0.0
    %1490 = vadd.xlane.f32.xlu0 %v1489
    %v1491 = vpop.xlane.xlu0 %1490
    %v1492 = vsel %vm66, %v1452, 0.0
    %1493 = vadd.xlane.f32.xlu0 %v1492
    %v1494 = vpop.xlane.xlu0 %1493
    %v1495 = vsel %vm66, %v1453, 0.0
    %1496 = vadd.xlane.f32.xlu0 %v1495
    %v1497 = vpop.xlane.xlu0 %1496
    %v1498 = vsel %vm66, %v1454, 0.0
    %1499 = vadd.xlane.f32.xlu0 %v1498
    %v1500 = vpop.xlane.xlu0 %1499
    %v1501 = vsel %vm66, %v1455, 0.0
    %1502 = vadd.xlane.f32.xlu0 %v1501
    %v1503 = vpop.xlane.xlu0 %1502
    %v1504 = vrcp.pop 16.0
    %v1505 = vmul.f32 16.0, %v1504
    %v1506 = vsub.f32 1.0, %v1505
    %v1507 = vmul.f32 %v1504, %v1506
    %v1508 = vadd.f32 %v1504, %v1507
    %vm1509 = vweird.f32 %v1504
    %v1510 = vsel %vm1509, %v1504, %v1508
    %v1511 = vmul.f32 %v1458, %v1510
    %v1512 = vmul.f32 %v1461, %v1510
    %v1513 = vmul.f32 %v1464, %v1510
    %v1514 = vmul.f32 %v1467, %v1510
    %v1515 = vmul.f32 %v1470, %v1510
    %v1516 = vmul.f32 %v1473, %v1510
    %v1517 = vmul.f32 %v1476, %v1510
    %v1518 = vmul.f32 %v1479, %v1510
    %v1519 = vmul.f32 %v1482, %v1510
    %v1520 = vmul.f32 %v1485, %v1510
    %v1521 = vmul.f32 %v1488, %v1510
    %v1522 = vmul.f32 %v1491, %v1510
    %v1523 = vmul.f32 %v1494, %v1510
    %v1524 = vmul.f32 %v1497, %v1510
    %v1525 = vmul.f32 %v1500, %v1510
    %v1526 = vmul.f32 %v1503, %v1510
    %v1527 = vmul.f32 %v1511, 5.0
    %v1528 = vmul.f32 %v1512, 5.0
    %v1529 = vmul.f32 %v1513, 5.0
    %v1530 = vmul.f32 %v1514, 5.0
    %v1531 = vmul.f32 %v1515, 5.0
    %v1532 = vmul.f32 %v1516, 5.0
    %v1533 = vmul.f32 %v1517, 5.0
    %v1534 = vmul.f32 %v1518, 5.0
    %v1535 = vmul.f32 %v1519, 5.0
    %v1536 = vmul.f32 %v1520, 5.0
    %v1537 = vmul.f32 %v1521, 5.0
    %v1538 = vmul.f32 %v1522, 5.0
    %v1539 = vmul.f32 %v1523, 5.0
    %v1540 = vmul.f32 %v1524, 5.0
    %v1541 = vmul.f32 %v1525, 5.0
    %v1542 = vmul.f32 %v1526, 5.0
    %v1543 = vmax.f32 %v1527, 0.0
    %v1544 = vmax.f32 %v1528, 0.0
    %v1545 = vmax.f32 %v1529, 0.0
    %v1546 = vmax.f32 %v1530, 0.0
    %v1547 = vmax.f32 %v1531, 0.0
    %v1548 = vmax.f32 %v1532, 0.0
    %v1549 = vmax.f32 %v1533, 0.0
    %v1550 = vmax.f32 %v1534, 0.0
    %v1551 = vmax.f32 %v1535, 0.0
    %v1552 = vmax.f32 %v1536, 0.0
    %v1553 = vmax.f32 %v1537, 0.0
    %v1554 = vmax.f32 %v1538, 0.0
    %v1555 = vmax.f32 %v1539, 0.0
    %v1556 = vmax.f32 %v1540, 0.0
    %v1557 = vmax.f32 %v1541, 0.0
    %v1558 = vmax.f32 %v1542, 0.0
    %v1559 = vmin.f32 %v1543, 1.0
    %v1560 = vmin.f32 %v1544, 1.0
    %v1561 = vmin.f32 %v1545, 1.0
    %v1562 = vmin.f32 %v1546, 1.0
    %v1563 = vmin.f32 %v1547, 1.0
    %v1564 = vmin.f32 %v1548, 1.0
    %v1565 = vmin.f32 %v1549, 1.0
    %v1566 = vmin.f32 %v1550, 1.0
    %v1567 = vmin.f32 %v1551, 1.0
    %v1568 = vmin.f32 %v1552, 1.0
    %v1569 = vmin.f32 %v1553, 1.0
    %v1570 = vmin.f32 %v1554, 1.0
    %v1571 = vmin.f32 %v1555, 1.0
    %v1572 = vmin.f32 %v1556, 1.0
    %v1573 = vmin.f32 %v1557, 1.0
    %v1574 = vmin.f32 %v1558, 1.0
    %v1575 = vround.ne.pseudo %v1559
    %v1576 = vround.ne.pseudo %v1560
    %v1577 = vround.ne.pseudo %v1561
    %v1578 = vround.ne.pseudo %v1562
    %v1579 = vround.ne.pseudo %v1563
    %v1580 = vround.ne.pseudo %v1564
    %v1581 = vround.ne.pseudo %v1565
    %v1582 = vround.ne.pseudo %v1566
    %v1583 = vround.ne.pseudo %v1567
    %v1584 = vround.ne.pseudo %v1568
    %v1585 = vround.ne.pseudo %v1569
    %v1586 = vround.ne.pseudo %v1570
    %v1587 = vround.ne.pseudo %v1571
    %v1588 = vround.ne.pseudo %v1572
    %v1589 = vround.ne.pseudo %v1573
    %v1590 = vround.ne.pseudo %v1574
    %v1591 = vsub.f32 1.0, %v1575
    %v1592 = vsub.f32 1.0, %v1576
    %v1593 = vsub.f32 1.0, %v1577
    %v1594 = vsub.f32 1.0, %v1578
    %v1595 = vsub.f32 1.0, %v1579
    %v1596 = vsub.f32 1.0, %v1580
    %v1597 = vsub.f32 1.0, %v1581
    %v1598 = vsub.f32 1.0, %v1582
    %v1599 = vsub.f32 1.0, %v1583
    %v1600 = vsub.f32 1.0, %v1584
    %v1601 = vsub.f32 1.0, %v1585
    %v1602 = vsub.f32 1.0, %v1586
    %v1603 = vsub.f32 1.0, %v1587
    %v1604 = vsub.f32 1.0, %v1588
    %v1605 = vsub.f32 1.0, %v1589
    %v1606 = vsub.f32 1.0, %v1590
    %v1607 = vmul.f32 %v1408, %v30
    %v1608 = vmul.f32 %v1409, %v31
    %v1609 = vmul.f32 %v1410, %v32
    %v1610 = vmul.f32 %v1411, %v33
    %v1611 = vmul.f32 %v1412, %v34
    %v1612 = vmul.f32 %v1413, %v35
    %v1613 = vmul.f32 %v1414, %v36
    %v1614 = vmul.f32 %v1415, %v37
    %v1615 = vmul.f32 %v1416, %v38
    %v1616 = vmul.f32 %v1417, %v39
    %v1617 = vmul.f32 %v1418, %v40
    %v1618 = vmul.f32 %v1419, %v41
    %v1619 = vmul.f32 %v1420, %v42
    %v1620 = vmul.f32 %v1421, %v43
    %v1621 = vmul.f32 %v1422, %v44
    %v1622 = vmul.f32 %v1423, %v45
    %v1623 = vsel %vm66, %v1607, 0.0
    %1624 = vadd.xlane.f32.xlu0 %v1623
    %v1625 = vpop.xlane.xlu0 %1624
    %v1626 = vsel %vm66, %v1608, 0.0
    %1627 = vadd.xlane.f32.xlu0 %v1626
    %v1628 = vpop.xlane.xlu0 %1627
    %v1629 = vsel %vm66, %v1609, 0.0
    %1630 = vadd.xlane.f32.xlu0 %v1629
    %v1631 = vpop.xlane.xlu0 %1630
    %v1632 = vsel %vm66, %v1610, 0.0
    %1633 = vadd.xlane.f32.xlu0 %v1632
    %v1634 = vpop.xlane.xlu0 %1633
    %v1635 = vsel %vm66, %v1611, 0.0
    %1636 = vadd.xlane.f32.xlu0 %v1635
    %v1637 = vpop.xlane.xlu0 %1636
    %v1638 = vsel %vm66, %v1612, 0.0
    %1639 = vadd.xlane.f32.xlu0 %v1638
    %v1640 = vpop.xlane.xlu0 %1639
    %v1641 = vsel %vm66, %v1613, 0.0
    %1642 = vadd.xlane.f32.xlu0 %v1641
    %v1643 = vpop.xlane.xlu0 %1642
    %v1644 = vsel %vm66, %v1614, 0.0
    %1645 = vadd.xlane.f32.xlu0 %v1644
    %v1646 = vpop.xlane.xlu0 %1645
    %v1647 = vsel %vm66, %v1615, 0.0
    %1648 = vadd.xlane.f32.xlu0 %v1647
    %v1649 = vpop.xlane.xlu0 %1648
    %v1650 = vsel %vm66, %v1616, 0.0
    %1651 = vadd.xlane.f32.xlu0 %v1650
    %v1652 = vpop.xlane.xlu0 %1651
    %v1653 = vsel %vm66, %v1617, 0.0
    %1654 = vadd.xlane.f32.xlu0 %v1653
    %v1655 = vpop.xlane.xlu0 %1654
    %v1656 = vsel %vm66, %v1618, 0.0
    %1657 = vadd.xlane.f32.xlu0 %v1656
    %v1658 = vpop.xlane.xlu0 %1657
    %v1659 = vsel %vm66, %v1619, 0.0
    %1660 = vadd.xlane.f32.xlu0 %v1659
    %v1661 = vpop.xlane.xlu0 %1660
    %v1662 = vsel %vm66, %v1620, 0.0
    %1663 = vadd.xlane.f32.xlu0 %v1662
    %v1664 = vpop.xlane.xlu0 %1663
    %v1665 = vsel %vm66, %v1621, 0.0
    %1666 = vadd.xlane.f32.xlu0 %v1665
    %v1667 = vpop.xlane.xlu0 %1666
    %v1668 = vsel %vm66, %v1622, 0.0
    %1669 = vadd.xlane.f32.xlu0 %v1668
    %v1670 = vpop.xlane.xlu0 %1669
    %v1671 = vmul.f32 %v1408, %v1408
    %v1672 = vmul.f32 %v1409, %v1409
    %v1673 = vmul.f32 %v1410, %v1410
    %v1674 = vmul.f32 %v1411, %v1411
    %v1675 = vmul.f32 %v1412, %v1412
    %v1676 = vmul.f32 %v1413, %v1413
    %v1677 = vmul.f32 %v1414, %v1414
    %v1678 = vmul.f32 %v1415, %v1415
    %v1679 = vmul.f32 %v1416, %v1416
    %v1680 = vmul.f32 %v1417, %v1417
    %v1681 = vmul.f32 %v1418, %v1418
    %v1682 = vmul.f32 %v1419, %v1419
    %v1683 = vmul.f32 %v1420, %v1420
    %v1684 = vmul.f32 %v1421, %v1421
    %v1685 = vmul.f32 %v1422, %v1422
    %v1686 = vmul.f32 %v1423, %v1423
    %v1687 = vsel %vm66, %v1671, 0.0
    %1688 = vadd.xlane.f32.xlu0 %v1687
    %v1689 = vpop.xlane.xlu0 %1688
    %v1690 = vsel %vm66, %v1672, 0.0
    %1691 = vadd.xlane.f32.xlu0 %v1690
    %v1692 = vpop.xlane.xlu0 %1691
    %v1693 = vsel %vm66, %v1673, 0.0
    %1694 = vadd.xlane.f32.xlu0 %v1693
    %v1695 = vpop.xlane.xlu0 %1694
    %v1696 = vsel %vm66, %v1674, 0.0
    %1697 = vadd.xlane.f32.xlu0 %v1696
    %v1698 = vpop.xlane.xlu0 %1697
    %v1699 = vsel %vm66, %v1675, 0.0
    %1700 = vadd.xlane.f32.xlu0 %v1699
    %v1701 = vpop.xlane.xlu0 %1700
    %v1702 = vsel %vm66, %v1676, 0.0
    %1703 = vadd.xlane.f32.xlu0 %v1702
    %v1704 = vpop.xlane.xlu0 %1703
    %v1705 = vsel %vm66, %v1677, 0.0
    %1706 = vadd.xlane.f32.xlu0 %v1705
    %v1707 = vpop.xlane.xlu0 %1706
    %v1708 = vsel %vm66, %v1678, 0.0
    %1709 = vadd.xlane.f32.xlu0 %v1708
    %v1710 = vpop.xlane.xlu0 %1709
    %v1711 = vsel %vm66, %v1679, 0.0
    %1712 = vadd.xlane.f32.xlu0 %v1711
    %v1713 = vpop.xlane.xlu0 %1712
    %v1714 = vsel %vm66, %v1680, 0.0
    %1715 = vadd.xlane.f32.xlu0 %v1714
    %v1716 = vpop.xlane.xlu0 %1715
    %v1717 = vsel %vm66, %v1681, 0.0
    %1718 = vadd.xlane.f32.xlu0 %v1717
    %v1719 = vpop.xlane.xlu0 %1718
    %v1720 = vsel %vm66, %v1682, 0.0
    %1721 = vadd.xlane.f32.xlu0 %v1720
    %v1722 = vpop.xlane.xlu0 %1721
    %v1723 = vsel %vm66, %v1683, 0.0
    %1724 = vadd.xlane.f32.xlu0 %v1723
    %v1725 = vpop.xlane.xlu0 %1724
    %v1726 = vsel %vm66, %v1684, 0.0
    %1727 = vadd.xlane.f32.xlu0 %v1726
    %v1728 = vpop.xlane.xlu0 %1727
    %v1729 = vsel %vm66, %v1685, 0.0
    %1730 = vadd.xlane.f32.xlu0 %v1729
    %v1731 = vpop.xlane.xlu0 %1730
    %v1732 = vsel %vm66, %v1686, 0.0
    %1733 = vadd.xlane.f32.xlu0 %v1732
    %v1734 = vpop.xlane.xlu0 %1733
    %v1735 = vmul.f32 %v30, %v30
    %v1736 = vmul.f32 %v31, %v31
    %v1737 = vmul.f32 %v32, %v32
    %v1738 = vmul.f32 %v33, %v33
    %v1739 = vmul.f32 %v34, %v34
    %v1740 = vmul.f32 %v35, %v35
    %v1741 = vmul.f32 %v36, %v36
    %v1742 = vmul.f32 %v37, %v37
    %v1743 = vmul.f32 %v38, %v38
    %v1744 = vmul.f32 %v39, %v39
    %v1745 = vmul.f32 %v40, %v40
    %v1746 = vmul.f32 %v41, %v41
    %v1747 = vmul.f32 %v42, %v42
    %v1748 = vmul.f32 %v43, %v43
    %v1749 = vmul.f32 %v44, %v44
    %v1750 = vmul.f32 %v45, %v45
    %v1751 = vsel %vm66, %v1735, 0.0
    %1752 = vadd.xlane.f32.xlu0 %v1751
    %v1753 = vpop.xlane.xlu0 %1752
    %v1754 = vsel %vm66, %v1736, 0.0
    %1755 = vadd.xlane.f32.xlu0 %v1754
    %v1756 = vpop.xlane.xlu0 %1755
    %v1757 = vsel %vm66, %v1737, 0.0
    %1758 = vadd.xlane.f32.xlu0 %v1757
    %v1759 = vpop.xlane.xlu0 %1758
    %v1760 = vsel %vm66, %v1738, 0.0
    %1761 = vadd.xlane.f32.xlu0 %v1760
    %v1762 = vpop.xlane.xlu0 %1761
    %v1763 = vsel %vm66, %v1739, 0.0
    %1764 = vadd.xlane.f32.xlu0 %v1763
    %v1765 = vpop.xlane.xlu0 %1764
    %v1766 = vsel %vm66, %v1740, 0.0
    %1767 = vadd.xlane.f32.xlu0 %v1766
    %v1768 = vpop.xlane.xlu0 %1767
    %v1769 = vsel %vm66, %v1741, 0.0
    %1770 = vadd.xlane.f32.xlu0 %v1769
    %v1771 = vpop.xlane.xlu0 %1770
    %v1772 = vsel %vm66, %v1742, 0.0
    %1773 = vadd.xlane.f32.xlu0 %v1772
    %v1774 = vpop.xlane.xlu0 %1773
    %v1775 = vsel %vm66, %v1743, 0.0
    %1776 = vadd.xlane.f32.xlu0 %v1775
    %v1777 = vpop.xlane.xlu0 %1776
    %v1778 = vsel %vm66, %v1744, 0.0
    %1779 = vadd.xlane.f32.xlu0 %v1778
    %v1780 = vpop.xlane.xlu0 %1779
    %v1781 = vsel %vm66, %v1745, 0.0
    %1782 = vadd.xlane.f32.xlu0 %v1781
    %v1783 = vpop.xlane.xlu0 %1782
    %v1784 = vsel %vm66, %v1746, 0.0
    %1785 = vadd.xlane.f32.xlu0 %v1784
    %v1786 = vpop.xlane.xlu0 %1785
    %v1787 = vsel %vm66, %v1747, 0.0
    %1788 = vadd.xlane.f32.xlu0 %v1787
    %v1789 = vpop.xlane.xlu0 %1788
    %v1790 = vsel %vm66, %v1748, 0.0
    %1791 = vadd.xlane.f32.xlu0 %v1790
    %v1792 = vpop.xlane.xlu0 %1791
    %v1793 = vsel %vm66, %v1749, 0.0
    %1794 = vadd.xlane.f32.xlu0 %v1793
    %v1795 = vpop.xlane.xlu0 %1794
    %v1796 = vsel %vm66, %v1750, 0.0
    %1797 = vadd.xlane.f32.xlu0 %v1796
    %v1798 = vpop.xlane.xlu0 %1797
    %v1799 = vmax.f32 %v1689, 1e-16
    %v1800 = vmax.f32 %v1692, 1e-16
    %v1801 = vmax.f32 %v1695, 1e-16
    %v1802 = vmax.f32 %v1698, 1e-16
    %v1803 = vmax.f32 %v1701, 1e-16
    %v1804 = vmax.f32 %v1704, 1e-16
    %v1805 = vmax.f32 %v1707, 1e-16
    %v1806 = vmax.f32 %v1710, 1e-16
    %v1807 = vmax.f32 %v1713, 1e-16
    %v1808 = vmax.f32 %v1716, 1e-16
    %v1809 = vmax.f32 %v1719, 1e-16
    %v1810 = vmax.f32 %v1722, 1e-16
    %v1811 = vmax.f32 %v1725, 1e-16
    %v1812 = vmax.f32 %v1728, 1e-16
    %v1813 = vmax.f32 %v1731, 1e-16
    %v1814 = vmax.f32 %v1734, 1e-16
    %v1815 = vrsqrt.pop %v1799
    %v1816 = vmul.f32 %v1815, %v1799
    %v1817 = vmul.f32 %v1816, %v1815
    %v1818 = vmul.f32 0.5, %v1817
    %v1819 = vsub.f32 1.5, %v1818
    %v1820 = vmul.f32 %v1815, %v1819
    %vm1821 = vweird.f32 %v1799
    %vm1822 = vweird.f32 %v1815
    %vm1823 = vmor %vm1821, %vm1822
    %v1824 = vsel %vm1823, %v1815, %v1820
    %v1825 = vrsqrt.pop %v1800
    %v1826 = vmul.f32 %v1825, %v1800
    %v1827 = vmul.f32 %v1826, %v1825
    %v1828 = vmul.f32 0.5, %v1827
    %v1829 = vsub.f32 1.5, %v1828
    %v1830 = vmul.f32 %v1825, %v1829
    %vm1831 = vweird.f32 %v1800
    %vm1832 = vweird.f32 %v1825
    %vm1833 = vmor %vm1831, %vm1832
    %v1834 = vsel %vm1833, %v1825, %v1830
    %v1835 = vrsqrt.pop %v1801
    %v1836 = vmul.f32 %v1835, %v1801
    %v1837 = vmul.f32 %v1836, %v1835
    %v1838 = vmul.f32 0.5, %v1837
    %v1839 = vsub.f32 1.5, %v1838
    %v1840 = vmul.f32 %v1835, %v1839
    %vm1841 = vweird.f32 %v1801
    %vm1842 = vweird.f32 %v1835
    %vm1843 = vmor %vm1841, %vm1842
    %v1844 = vsel %vm1843, %v1835, %v1840
    %v1845 = vrsqrt.pop %v1802
    %v1846 = vmul.f32 %v1845, %v1802
    %v1847 = vmul.f32 %v1846, %v1845
    %v1848 = vmul.f32 0.5, %v1847
    %v1849 = vsub.f32 1.5, %v1848
    %v1850 = vmul.f32 %v1845, %v1849
    %vm1851 = vweird.f32 %v1802
    %vm1852 = vweird.f32 %v1845
    %vm1853 = vmor %vm1851, %vm1852
    %v1854 = vsel %vm1853, %v1845, %v1850
    %v1855 = vrsqrt.pop %v1803
    %v1856 = vmul.f32 %v1855, %v1803
    %v1857 = vmul.f32 %v1856, %v1855
    %v1858 = vmul.f32 0.5, %v1857
    %v1859 = vsub.f32 1.5, %v1858
    %v1860 = vmul.f32 %v1855, %v1859
    %vm1861 = vweird.f32 %v1803
    %vm1862 = vweird.f32 %v1855
    %vm1863 = vmor %vm1861, %vm1862
    %v1864 = vsel %vm1863, %v1855, %v1860
    %v1865 = vrsqrt.pop %v1804
    %v1866 = vmul.f32 %v1865, %v1804
    %v1867 = vmul.f32 %v1866, %v1865
    %v1868 = vmul.f32 0.5, %v1867
    %v1869 = vsub.f32 1.5, %v1868
    %v1870 = vmul.f32 %v1865, %v1869
    %vm1871 = vweird.f32 %v1804
    %vm1872 = vweird.f32 %v1865
    %vm1873 = vmor %vm1871, %vm1872
    %v1874 = vsel %vm1873, %v1865, %v1870
    %v1875 = vrsqrt.pop %v1805
    %v1876 = vmul.f32 %v1875, %v1805
    %v1877 = vmul.f32 %v1876, %v1875
    %v1878 = vmul.f32 0.5, %v1877
    %v1879 = vsub.f32 1.5, %v1878
    %v1880 = vmul.f32 %v1875, %v1879
    %vm1881 = vweird.f32 %v1805
    %vm1882 = vweird.f32 %v1875
    %vm1883 = vmor %vm1881, %vm1882
    %v1884 = vsel %vm1883, %v1875, %v1880
    %v1885 = vrsqrt.pop %v1806
    %v1886 = vmul.f32 %v1885, %v1806
    %v1887 = vmul.f32 %v1886, %v1885
    %v1888 = vmul.f32 0.5, %v1887
    %v1889 = vsub.f32 1.5, %v1888
    %v1890 = vmul.f32 %v1885, %v1889
    %vm1891 = vweird.f32 %v1806
    %vm1892 = vweird.f32 %v1885
    %vm1893 = vmor %vm1891, %vm1892
    %v1894 = vsel %vm1893, %v1885, %v1890
    %v1895 = vrsqrt.pop %v1807
    %v1896 = vmul.f32 %v1895, %v1807
    %v1897 = vmul.f32 %v1896, %v1895
    %v1898 = vmul.f32 0.5, %v1897
    %v1899 = vsub.f32 1.5, %v1898
    %v1900 = vmul.f32 %v1895, %v1899
    %vm1901 = vweird.f32 %v1807
    %vm1902 = vweird.f32 %v1895
    %vm1903 = vmor %vm1901, %vm1902
    %v1904 = vsel %vm1903, %v1895, %v1900
    %v1905 = vrsqrt.pop %v1808
    %v1906 = vmul.f32 %v1905, %v1808
    %v1907 = vmul.f32 %v1906, %v1905
    %v1908 = vmul.f32 0.5, %v1907
    %v1909 = vsub.f32 1.5, %v1908
    %v1910 = vmul.f32 %v1905, %v1909
    %vm1911 = vweird.f32 %v1808
    %vm1912 = vweird.f32 %v1905
    %vm1913 = vmor %vm1911, %vm1912
    %v1914 = vsel %vm1913, %v1905, %v1910
    %v1915 = vrsqrt.pop %v1809
    %v1916 = vmul.f32 %v1915, %v1809
    %v1917 = vmul.f32 %v1916, %v1915
    %v1918 = vmul.f32 0.5, %v1917
    %v1919 = vsub.f32 1.5, %v1918
    %v1920 = vmul.f32 %v1915, %v1919
    %vm1921 = vweird.f32 %v1809
    %vm1922 = vweird.f32 %v1915
    %vm1923 = vmor %vm1921, %vm1922
    %v1924 = vsel %vm1923, %v1915, %v1920
    %v1925 = vrsqrt.pop %v1810
    %v1926 = vmul.f32 %v1925, %v1810
    %v1927 = vmul.f32 %v1926, %v1925
    %v1928 = vmul.f32 0.5, %v1927
    %v1929 = vsub.f32 1.5, %v1928
    %v1930 = vmul.f32 %v1925, %v1929
    %vm1931 = vweird.f32 %v1810
    %vm1932 = vweird.f32 %v1925
    %vm1933 = vmor %vm1931, %vm1932
    %v1934 = vsel %vm1933, %v1925, %v1930
    %v1935 = vrsqrt.pop %v1811
    %v1936 = vmul.f32 %v1935, %v1811
    %v1937 = vmul.f32 %v1936, %v1935
    %v1938 = vmul.f32 0.5, %v1937
    %v1939 = vsub.f32 1.5, %v1938
    %v1940 = vmul.f32 %v1935, %v1939
    %vm1941 = vweird.f32 %v1811
    %vm1942 = vweird.f32 %v1935
    %vm1943 = vmor %vm1941, %vm1942
    %v1944 = vsel %vm1943, %v1935, %v1940
    %v1945 = vrsqrt.pop %v1812
    %v1946 = vmul.f32 %v1945, %v1812
    %v1947 = vmul.f32 %v1946, %v1945
    %v1948 = vmul.f32 0.5, %v1947
    %v1949 = vsub.f32 1.5, %v1948
    %v1950 = vmul.f32 %v1945, %v1949
    %vm1951 = vweird.f32 %v1812
    %vm1952 = vweird.f32 %v1945
    %vm1953 = vmor %vm1951, %vm1952
    %v1954 = vsel %vm1953, %v1945, %v1950
    %v1955 = vrsqrt.pop %v1813
    %v1956 = vmul.f32 %v1955, %v1813
    %v1957 = vmul.f32 %v1956, %v1955
    %v1958 = vmul.f32 0.5, %v1957
    %v1959 = vsub.f32 1.5, %v1958
    %v1960 = vmul.f32 %v1955, %v1959
    %vm1961 = vweird.f32 %v1813
    %vm1962 = vweird.f32 %v1955
    %vm1963 = vmor %vm1961, %vm1962
    %v1964 = vsel %vm1963, %v1955, %v1960
    %v1965 = vrsqrt.pop %v1814
    %v1966 = vmul.f32 %v1965, %v1814
    %v1967 = vmul.f32 %v1966, %v1965
    %v1968 = vmul.f32 0.5, %v1967
    %v1969 = vsub.f32 1.5, %v1968
    %v1970 = vmul.f32 %v1965, %v1969
    %vm1971 = vweird.f32 %v1814
    %vm1972 = vweird.f32 %v1965
    %vm1973 = vmor %vm1971, %vm1972
    %v1974 = vsel %vm1973, %v1965, %v1970
    %v1975 = vmul.f32 %v1625, %v1824
    %v1976 = vmul.f32 %v1628, %v1834
    %v1977 = vmul.f32 %v1631, %v1844
    %v1978 = vmul.f32 %v1634, %v1854
    %v1979 = vmul.f32 %v1637, %v1864
    %v1980 = vmul.f32 %v1640, %v1874
    %v1981 = vmul.f32 %v1643, %v1884
    %v1982 = vmul.f32 %v1646, %v1894
    %v1983 = vmul.f32 %v1649, %v1904
    %v1984 = vmul.f32 %v1652, %v1914
    %v1985 = vmul.f32 %v1655, %v1924
    %v1986 = vmul.f32 %v1658, %v1934
    %v1987 = vmul.f32 %v1661, %v1944
    %v1988 = vmul.f32 %v1664, %v1954
    %v1989 = vmul.f32 %v1667, %v1964
    %v1990 = vmul.f32 %v1670, %v1974
    %v1991 = vmax.f32 %v1753, 1e-16
    %v1992 = vmax.f32 %v1756, 1e-16
    %v1993 = vmax.f32 %v1759, 1e-16
    %v1994 = vmax.f32 %v1762, 1e-16
    %v1995 = vmax.f32 %v1765, 1e-16
    %v1996 = vmax.f32 %v1768, 1e-16
    %v1997 = vmax.f32 %v1771, 1e-16
    %v1998 = vmax.f32 %v1774, 1e-16
    %v1999 = vmax.f32 %v1777, 1e-16
    %v2000 = vmax.f32 %v1780, 1e-16
    %v2001 = vmax.f32 %v1783, 1e-16
    %v2002 = vmax.f32 %v1786, 1e-16
    %v2003 = vmax.f32 %v1789, 1e-16
    %v2004 = vmax.f32 %v1792, 1e-16
    %v2005 = vmax.f32 %v1795, 1e-16
    %v2006 = vmax.f32 %v1798, 1e-16
    %v2007 = vrsqrt.pop %v1991
    %v2008 = vmul.f32 %v2007, %v1991
    %v2009 = vmul.f32 %v2008, %v2007
    %v2010 = vmul.f32 0.5, %v2009
    %v2011 = vsub.f32 1.5, %v2010
    %v2012 = vmul.f32 %v2007, %v2011
    %vm2013 = vweird.f32 %v1991
    %vm2014 = vweird.f32 %v2007
    %vm2015 = vmor %vm2013, %vm2014
    %v2016 = vsel %vm2015, %v2007, %v2012
    %v2017 = vrsqrt.pop %v1992
    %v2018 = vmul.f32 %v2017, %v1992
    %v2019 = vmul.f32 %v2018, %v2017
    %v2020 = vmul.f32 0.5, %v2019
    %v2021 = vsub.f32 1.5, %v2020
    %v2022 = vmul.f32 %v2017, %v2021
    %vm2023 = vweird.f32 %v1992
    %vm2024 = vweird.f32 %v2017
    %vm2025 = vmor %vm2023, %vm2024
    %v2026 = vsel %vm2025, %v2017, %v2022
    %v2027 = vrsqrt.pop %v1993
    %v2028 = vmul.f32 %v2027, %v1993
    %v2029 = vmul.f32 %v2028, %v2027
    %v2030 = vmul.f32 0.5, %v2029
    %v2031 = vsub.f32 1.5, %v2030
    %v2032 = vmul.f32 %v2027, %v2031
    %vm2033 = vweird.f32 %v1993
    %vm2034 = vweird.f32 %v2027
    %vm2035 = vmor %vm2033, %vm2034
    %v2036 = vsel %vm2035, %v2027, %v2032
    %v2037 = vrsqrt.pop %v1994
    %v2038 = vmul.f32 %v2037, %v1994
    %v2039 = vmul.f32 %v2038, %v2037
    %v2040 = vmul.f32 0.5, %v2039
    %v2041 = vsub.f32 1.5, %v2040
    %v2042 = vmul.f32 %v2037, %v2041
    %vm2043 = vweird.f32 %v1994
    %vm2044 = vweird.f32 %v2037
    %vm2045 = vmor %vm2043, %vm2044
    %v2046 = vsel %vm2045, %v2037, %v2042
    %v2047 = vrsqrt.pop %v1995
    %v2048 = vmul.f32 %v2047, %v1995
    %v2049 = vmul.f32 %v2048, %v2047
    %v2050 = vmul.f32 0.5, %v2049
    %v2051 = vsub.f32 1.5, %v2050
    %v2052 = vmul.f32 %v2047, %v2051
    %vm2053 = vweird.f32 %v1995
    %vm2054 = vweird.f32 %v2047
    %vm2055 = vmor %vm2053, %vm2054
    %v2056 = vsel %vm2055, %v2047, %v2052
    %v2057 = vrsqrt.pop %v1996
    %v2058 = vmul.f32 %v2057, %v1996
    %v2059 = vmul.f32 %v2058, %v2057
    %v2060 = vmul.f32 0.5, %v2059
    %v2061 = vsub.f32 1.5, %v2060
    %v2062 = vmul.f32 %v2057, %v2061
    %vm2063 = vweird.f32 %v1996
    %vm2064 = vweird.f32 %v2057
    %vm2065 = vmor %vm2063, %vm2064
    %v2066 = vsel %vm2065, %v2057, %v2062
    %v2067 = vrsqrt.pop %v1997
    %v2068 = vmul.f32 %v2067, %v1997
    %v2069 = vmul.f32 %v2068, %v2067
    %v2070 = vmul.f32 0.5, %v2069
    %v2071 = vsub.f32 1.5, %v2070
    %v2072 = vmul.f32 %v2067, %v2071
    %vm2073 = vweird.f32 %v1997
    %vm2074 = vweird.f32 %v2067
    %vm2075 = vmor %vm2073, %vm2074
    %v2076 = vsel %vm2075, %v2067, %v2072
    %v2077 = vrsqrt.pop %v1998
    %v2078 = vmul.f32 %v2077, %v1998
    %v2079 = vmul.f32 %v2078, %v2077
    %v2080 = vmul.f32 0.5, %v2079
    %v2081 = vsub.f32 1.5, %v2080
    %v2082 = vmul.f32 %v2077, %v2081
    %vm2083 = vweird.f32 %v1998
    %vm2084 = vweird.f32 %v2077
    %vm2085 = vmor %vm2083, %vm2084
    %v2086 = vsel %vm2085, %v2077, %v2082
    %v2087 = vrsqrt.pop %v1999
    %v2088 = vmul.f32 %v2087, %v1999
    %v2089 = vmul.f32 %v2088, %v2087
    %v2090 = vmul.f32 0.5, %v2089
    %v2091 = vsub.f32 1.5, %v2090
    %v2092 = vmul.f32 %v2087, %v2091
    %vm2093 = vweird.f32 %v1999
    %vm2094 = vweird.f32 %v2087
    %vm2095 = vmor %vm2093, %vm2094
    %v2096 = vsel %vm2095, %v2087, %v2092
    %v2097 = vrsqrt.pop %v2000
    %v2098 = vmul.f32 %v2097, %v2000
    %v2099 = vmul.f32 %v2098, %v2097
    %v2100 = vmul.f32 0.5, %v2099
    %v2101 = vsub.f32 1.5, %v2100
    %v2102 = vmul.f32 %v2097, %v2101
    %vm2103 = vweird.f32 %v2000
    %vm2104 = vweird.f32 %v2097
    %vm2105 = vmor %vm2103, %vm2104
    %v2106 = vsel %vm2105, %v2097, %v2102
    %v2107 = vrsqrt.pop %v2001
    %v2108 = vmul.f32 %v2107, %v2001
    %v2109 = vmul.f32 %v2108, %v2107
    %v2110 = vmul.f32 0.5, %v2109
    %v2111 = vsub.f32 1.5, %v2110
    %v2112 = vmul.f32 %v2107, %v2111
    %vm2113 = vweird.f32 %v2001
    %vm2114 = vweird.f32 %v2107
    %vm2115 = vmor %vm2113, %vm2114
    %v2116 = vsel %vm2115, %v2107, %v2112
    %v2117 = vrsqrt.pop %v2002
    %v2118 = vmul.f32 %v2117, %v2002
    %v2119 = vmul.f32 %v2118, %v2117
    %v2120 = vmul.f32 0.5, %v2119
    %v2121 = vsub.f32 1.5, %v2120
    %v2122 = vmul.f32 %v2117, %v2121
    %vm2123 = vweird.f32 %v2002
    %vm2124 = vweird.f32 %v2117
    %vm2125 = vmor %vm2123, %vm2124
    %v2126 = vsel %vm2125, %v2117, %v2122
    %v2127 = vrsqrt.pop %v2003
    %v2128 = vmul.f32 %v2127, %v2003
    %v2129 = vmul.f32 %v2128, %v2127
    %v2130 = vmul.f32 0.5, %v2129
    %v2131 = vsub.f32 1.5, %v2130
    %v2132 = vmul.f32 %v2127, %v2131
    %vm2133 = vweird.f32 %v2003
    %vm2134 = vweird.f32 %v2127
    %vm2135 = vmor %vm2133, %vm2134
    %v2136 = vsel %vm2135, %v2127, %v2132
    %v2137 = vrsqrt.pop %v2004
    %v2138 = vmul.f32 %v2137, %v2004
    %v2139 = vmul.f32 %v2138, %v2137
    %v2140 = vmul.f32 0.5, %v2139
    %v2141 = vsub.f32 1.5, %v2140
    %v2142 = vmul.f32 %v2137, %v2141
    %vm2143 = vweird.f32 %v2004
    %vm2144 = vweird.f32 %v2137
    %vm2145 = vmor %vm2143, %vm2144
    %v2146 = vsel %vm2145, %v2137, %v2142
    %v2147 = vrsqrt.pop %v2005
    %v2148 = vmul.f32 %v2147, %v2005
    %v2149 = vmul.f32 %v2148, %v2147
    %v2150 = vmul.f32 0.5, %v2149
    %v2151 = vsub.f32 1.5, %v2150
    %v2152 = vmul.f32 %v2147, %v2151
    %vm2153 = vweird.f32 %v2005
    %vm2154 = vweird.f32 %v2147
    %vm2155 = vmor %vm2153, %vm2154
    %v2156 = vsel %vm2155, %v2147, %v2152
    %v2157 = vrsqrt.pop %v2006
    %v2158 = vmul.f32 %v2157, %v2006
    %v2159 = vmul.f32 %v2158, %v2157
    %v2160 = vmul.f32 0.5, %v2159
    %v2161 = vsub.f32 1.5, %v2160
    %v2162 = vmul.f32 %v2157, %v2161
    %vm2163 = vweird.f32 %v2006
    %vm2164 = vweird.f32 %v2157
    %vm2165 = vmor %vm2163, %vm2164
    %v2166 = vsel %vm2165, %v2157, %v2162
    %v2167 = vmul.f32 %v1975, %v2016
    %v2168 = vmul.f32 %v1976, %v2026
    %v2169 = vmul.f32 %v1977, %v2036
    %v2170 = vmul.f32 %v1978, %v2046
    %v2171 = vmul.f32 %v1979, %v2056
    %v2172 = vmul.f32 %v1980, %v2066
    %v2173 = vmul.f32 %v1981, %v2076
    %v2174 = vmul.f32 %v1982, %v2086
    %v2175 = vmul.f32 %v1983, %v2096
    %v2176 = vmul.f32 %v1984, %v2106
    %v2177 = vmul.f32 %v1985, %v2116
    %v2178 = vmul.f32 %v1986, %v2126
    %v2179 = vmul.f32 %v1987, %v2136
    %v2180 = vmul.f32 %v1988, %v2146
    %v2181 = vmul.f32 %v1989, %v2156
    %v2182 = vmul.f32 %v1990, %v2166
    %v2183 = vmul.f32 %v1591, 0.5
    %v2184 = vmul.f32 %v1592, 0.5
    %v2185 = vmul.f32 %v1593, 0.5
    %v2186 = vmul.f32 %v1594, 0.5
    %v2187 = vmul.f32 %v1595, 0.5
    %v2188 = vmul.f32 %v1596, 0.5
    %v2189 = vmul.f32 %v1597, 0.5
    %v2190 = vmul.f32 %v1598, 0.5
    %v2191 = vmul.f32 %v1599, 0.5
    %v2192 = vmul.f32 %v1600, 0.5
    %v2193 = vmul.f32 %v1601, 0.5
    %v2194 = vmul.f32 %v1602, 0.5
    %v2195 = vmul.f32 %v1603, 0.5
    %v2196 = vmul.f32 %v1604, 0.5
    %v2197 = vmul.f32 %v1605, 0.5
    %v2198 = vmul.f32 %v1606, 0.5
    %v2199 = vmul.f32 %v2167, 0.5
    %v2200 = vmul.f32 %v2168, 0.5
    %v2201 = vmul.f32 %v2169, 0.5
    %v2202 = vmul.f32 %v2170, 0.5
    %v2203 = vmul.f32 %v2171, 0.5
    %v2204 = vmul.f32 %v2172, 0.5
    %v2205 = vmul.f32 %v2173, 0.5
    %v2206 = vmul.f32 %v2174, 0.5
    %v2207 = vmul.f32 %v2175, 0.5
    %v2208 = vmul.f32 %v2176, 0.5
    %v2209 = vmul.f32 %v2177, 0.5
    %v2210 = vmul.f32 %v2178, 0.5
    %v2211 = vmul.f32 %v2179, 0.5
    %v2212 = vmul.f32 %v2180, 0.5
    %v2213 = vmul.f32 %v2181, 0.5
    %v2214 = vmul.f32 %v2182, 0.5
    %v2215 = vadd.f32 %v2183, %v2199
    %v2216 = vadd.f32 %v2184, %v2200
    %v2217 = vadd.f32 %v2185, %v2201
    %v2218 = vadd.f32 %v2186, %v2202
    %v2219 = vadd.f32 %v2187, %v2203
    %v2220 = vadd.f32 %v2188, %v2204
    %v2221 = vadd.f32 %v2189, %v2205
    %v2222 = vadd.f32 %v2190, %v2206
    %v2223 = vadd.f32 %v2191, %v2207
    %v2224 = vadd.f32 %v2192, %v2208
    %v2225 = vadd.f32 %v2193, %v2209
    %v2226 = vadd.f32 %v2194, %v2210
    %v2227 = vadd.f32 %v2195, %v2211
    %v2228 = vadd.f32 %v2196, %v2212
    %v2229 = vadd.f32 %v2197, %v2213
    %v2230 = vadd.f32 %v2198, %v2214
    %v2231 = vmul.f32 %v2215, %v30
    %v2232 = vmul.f32 %v2216, %v31
    %v2233 = vmul.f32 %v2217, %v32
    %v2234 = vmul.f32 %v2218, %v33
    %v2235 = vmul.f32 %v2219, %v34
    %v2236 = vmul.f32 %v2220, %v35
    %v2237 = vmul.f32 %v2221, %v36
    %v2238 = vmul.f32 %v2222, %v37
    %v2239 = vmul.f32 %v2223, %v38
    %v2240 = vmul.f32 %v2224, %v39
    %v2241 = vmul.f32 %v2225, %v40
    %v2242 = vmul.f32 %v2226, %v41
    %v2243 = vmul.f32 %v2227, %v42
    %v2244 = vmul.f32 %v2228, %v43
    %v2245 = vmul.f32 %v2229, %v44
    %v2246 = vmul.f32 %v2230, %v45
    %v2247 = vsub.f32 1.0, %v2215
    %v2248 = vsub.f32 1.0, %v2216
    %v2249 = vsub.f32 1.0, %v2217
    %v2250 = vsub.f32 1.0, %v2218
    %v2251 = vsub.f32 1.0, %v2219
    %v2252 = vsub.f32 1.0, %v2220
    %v2253 = vsub.f32 1.0, %v2221
    %v2254 = vsub.f32 1.0, %v2222
    %v2255 = vsub.f32 1.0, %v2223
    %v2256 = vsub.f32 1.0, %v2224
    %v2257 = vsub.f32 1.0, %v2225
    %v2258 = vsub.f32 1.0, %v2226
    %v2259 = vsub.f32 1.0, %v2227
    %v2260 = vsub.f32 1.0, %v2228
    %v2261 = vsub.f32 1.0, %v2229
    %v2262 = vsub.f32 1.0, %v2230
    %v2263 = vmul.f32 %v2247, %v1408
    %v2264 = vmul.f32 %v2248, %v1409
    %v2265 = vmul.f32 %v2249, %v1410
    %v2266 = vmul.f32 %v2250, %v1411
    %v2267 = vmul.f32 %v2251, %v1412
    %v2268 = vmul.f32 %v2252, %v1413
    %v2269 = vmul.f32 %v2253, %v1414
    %v2270 = vmul.f32 %v2254, %v1415
    %v2271 = vmul.f32 %v2255, %v1416
    %v2272 = vmul.f32 %v2256, %v1417
    %v2273 = vmul.f32 %v2257, %v1418
    %v2274 = vmul.f32 %v2258, %v1419
    %v2275 = vmul.f32 %v2259, %v1420
    %v2276 = vmul.f32 %v2260, %v1421
    %v2277 = vmul.f32 %v2261, %v1422
    %v2278 = vmul.f32 %v2262, %v1423
    %v2279 = vadd.f32 %v2231, %v2263
    %v2280 = vadd.f32 %v2232, %v2264
    %v2281 = vadd.f32 %v2233, %v2265
    %v2282 = vadd.f32 %v2234, %v2266
    %v2283 = vadd.f32 %v2235, %v2267
    %v2284 = vadd.f32 %v2236, %v2268
    %v2285 = vadd.f32 %v2237, %v2269
    %v2286 = vadd.f32 %v2238, %v2270
    %v2287 = vadd.f32 %v2239, %v2271
    %v2288 = vadd.f32 %v2240, %v2272
    %v2289 = vadd.f32 %v2241, %v2273
    %v2290 = vadd.f32 %v2242, %v2274
    %v2291 = vadd.f32 %v2243, %v2275
    %v2292 = vadd.f32 %v2244, %v2276
    %v2293 = vadd.f32 %v2245, %v2277
    %v2294 = vadd.f32 %v2246, %v2278
    %2295 = vst.msk [vmem:[#allocation2] sm:$0xff] %vm66, %v2279
    %2296 = vst.msk [vmem:[#allocation2 + $0x8] sm:$0xff] %vm66, %v2280
    %2297 = vst.msk [vmem:[#allocation2 + $0x10] sm:$0xff] %vm66, %v2281
    %2298 = vst.msk [vmem:[#allocation2 + $0x18] sm:$0xff] %vm66, %v2282
    %2299 = vst.msk [vmem:[#allocation2 + $0x20] sm:$0xff] %vm66, %v2283
    %2300 = vst.msk [vmem:[#allocation2 + $0x28] sm:$0xff] %vm66, %v2284
    %2301 = vst.msk [vmem:[#allocation2 + $0x30] sm:$0xff] %vm66, %v2285
    %2302 = vst.msk [vmem:[#allocation2 + $0x38] sm:$0xff] %vm66, %v2286
    %2303 = vst.msk [vmem:[#allocation2 + $0x40] sm:$0xff] %vm66, %v2287
    %2304 = vst.msk [vmem:[#allocation2 + $0x48] sm:$0xff] %vm66, %v2288
    %2305 = vst.msk [vmem:[#allocation2 + $0x50] sm:$0xff] %vm66, %v2289
    %2306 = vst.msk [vmem:[#allocation2 + $0x58] sm:$0xff] %vm66, %v2290
    %2307 = vst.msk [vmem:[#allocation2 + $0x60] sm:$0xff] %vm66, %v2291
    %2308 = vst.msk [vmem:[#allocation2 + $0x68] sm:$0xff] %vm66, %v2292
    %2309 = vst.msk [vmem:[#allocation2 + $0x70] sm:$0xff] %vm66, %v2293
    %2310 = vst.msk [vmem:[#allocation2 + $0x78] sm:$0xff] %vm66, %v2294
    %v2311 = vsub.f32 %v2279, %v30
    %v2312 = vsub.f32 %v2280, %v31
    %v2313 = vsub.f32 %v2281, %v32
    %v2314 = vsub.f32 %v2282, %v33
    %v2315 = vsub.f32 %v2283, %v34
    %v2316 = vsub.f32 %v2284, %v35
    %v2317 = vsub.f32 %v2285, %v36
    %v2318 = vsub.f32 %v2286, %v37
    %v2319 = vsub.f32 %v2287, %v38
    %v2320 = vsub.f32 %v2288, %v39
    %v2321 = vsub.f32 %v2289, %v40
    %v2322 = vsub.f32 %v2290, %v41
    %v2323 = vsub.f32 %v2291, %v42
    %v2324 = vsub.f32 %v2292, %v43
    %v2325 = vsub.f32 %v2293, %v44
    %v2326 = vsub.f32 %v2294, %v45
    %v2327 = vmul.f32 %v2311, %v2311
    %v2328 = vmul.f32 %v2312, %v2312
    %v2329 = vmul.f32 %v2313, %v2313
    %v2330 = vmul.f32 %v2314, %v2314
    %v2331 = vmul.f32 %v2315, %v2315
    %v2332 = vmul.f32 %v2316, %v2316
    %v2333 = vmul.f32 %v2317, %v2317
    %v2334 = vmul.f32 %v2318, %v2318
    %v2335 = vmul.f32 %v2319, %v2319
    %v2336 = vmul.f32 %v2320, %v2320
    %v2337 = vmul.f32 %v2321, %v2321
    %v2338 = vmul.f32 %v2322, %v2322
    %v2339 = vmul.f32 %v2323, %v2323
    %v2340 = vmul.f32 %v2324, %v2324
    %v2341 = vmul.f32 %v2325, %v2325
    %v2342 = vmul.f32 %v2326, %v2326
    %v2344 = vsel %vm66, 1.0, 0
    %v2347 = vsel %vm66, %v2327, 0
    %v2350 = vsel %vm66, %v2328, 0
    %v2353 = vsel %vm66, %v2329, 0
    %v2356 = vsel %vm66, %v2330, 0
    %v2359 = vsel %vm66, %v2331, 0
    %v2362 = vsel %vm66, %v2332, 0
    %v2365 = vsel %vm66, %v2333, 0
    %v2368 = vsel %vm66, %v2334, 0
    %v2371 = vsel %vm66, %v2335, 0
    %v2374 = vsel %vm66, %v2336, 0
    %v2377 = vsel %vm66, %v2337, 0
    %v2380 = vsel %vm66, %v2338, 0
    %v2383 = vsel %vm66, %v2339, 0
    %v2386 = vsel %vm66, %v2340, 0
    %v2389 = vsel %vm66, %v2341, 0
    %v2392 = vsel %vm66, %v2342, 0
    %2394 = vmatpush.xpose.msra.mxu0 %v2392
    %2395 = vmatpush.xpose.msra.mxu0 %v2389
    %2396 = vmatpush.xpose.msra.mxu0 %v2386
    %2397 = vmatpush.xpose.msra.mxu0 %v2383
    %2398 = vmatpush.xpose.msra.mxu0 %v2380
    %2399 = vmatpush.xpose.msra.mxu0 %v2377
    %2400 = vmatpush.xpose.msra.mxu0 %v2374
    %2401 = vmatpush.xpose.msra.mxu0 %v2371
    %2402 = vmatpush.xpose.msra.mxu0 %v2368
    %2403 = vmatpush.xpose.msra.mxu0 %v2365
    %2404 = vmatpush.xpose.msra.mxu0 %v2362
    %2405 = vmatpush.xpose.msra.mxu0 %v2359
    %2406 = vmatpush.xpose.msra.mxu0 %v2356
    %2407 = vmatpush.xpose.msra.mxu0 %v2353
    %2408 = vmatpush.xpose.msra.mxu0 %v2350
    %2409 = vmatpush.xpose.msra.mxu0 %v2347
    %2410 = vmatmul.f32.gmra.mxu0 %v2344
    %v2411 = vpop.f32.mrf.mxu0
    %v2412 = vadd.f32 0.0, %v2411
    %2413 = vdwg.mxu0
    %v2414 = vrsqrt.pop %v2412
    %v2415 = vmul.f32 %v2414, %v2412
    %v2416 = vmul.f32 %v2415, %v2414
    %v2417 = vmul.f32 0.5, %v2416
    %v2418 = vsub.f32 1.5, %v2417
    %v2419 = vmul.f32 %v2414, %v2418
    %v2420 = vmul.f32 %v2412, %v2419
    %vm2421 = vcmp.eq.f32.partialorder %v2412, inf
    %v2422 = vsel %vm2421, %v2412, %v2420
    %vm2423 = vcmp.eq.f32.partialorder %v2412, 0.0
    %v2424 = vand.u32 %v2412, 2147483648
    %v2425 = vsel %vm2423, %v2424, %v2422
    %2426 = vst [vmem:[%s8] sm:$0x1] %v2425
    // Predicated region
    $region30: #{crad_forward.2} parent=1 // pred_check
      _
    $region31: #{crad_forward.2} parent=1 // pred_check_branch
      %2428 = sbr.rel (0) target = $region33
    $region32: #{crad_forward.2} parent=1 // pred_region
      %2430 = vsyncadd [#allocation3], 0
      %s2431 = sshll.u32 [#allocation2], 4
      %s2432 = int_to_ptr.vmem [resolvable:$true] %s2431
      %s2433 = sshll.u32 %s7, 4
      %s2434 = int_to_ptr.hbm [resolvable:$true] %s2433
      %2439 = dma.vmem_to_hbm [thread:$0]  %s2432, 2048, %s2434, [#allocation3], 128, 128, 8
    $region33: #{crad_forward.2} parent=1 // pred_fallthru
      _
    // Predicated region
    $region34: #{crad_forward.2} parent=1 // pred_check
      _
    $region35: #{crad_forward.2} parent=1 // pred_check_branch
      %2441 = sbr.rel (0) target = $region37
    $region36: #{crad_forward.2} parent=1 // pred_region
      _
    $region37: #{crad_forward.2} parent=1 // pred_fallthru
      _
    // Predicated region
    $region38: #{crad_forward.2} parent=1 // pred_check
      _
    $region39: #{crad_forward.2} parent=1 // pred_check_branch
      %2443 = sbr.rel (0) target = $region41
    $region40: #{crad_forward.2} parent=1 // pred_region
      %2445 = dma.done [#allocation3], 2048
    $region41: #{crad_forward.2} parent=1 // pred_fallthru
      _
    // Predicated region
    $region42: #{crad_forward.2} parent=1 // pred_check
      _
    $region43: #{crad_forward.2} parent=1 // pred_check_branch
      %2447 = sbr.rel (0) target = $region45
    $region44: #{crad_forward.2} parent=1 // pred_region
      _
    $region45: #{crad_forward.2} parent=1 // pred_fallthru
      _
    %2448 = vsyncpa [#allocation3], 1

</llo_original>
